<compile_context>
chip_gen: v5e
topology: v5e:2x2
jax: 0.10.0
libtpu: 0.0.40
codegen_flags: <defaults>
</compile_context>

<pallas_src>
import numpy as np
import jax
import jax.numpy as jnp
from jax.experimental import pallas as pl
from jax.experimental.pallas import tpu as pltpu

# ----------------------------- configuration --------------------------------
B = 2              # batch
N = 8              # num_nodes
T_IN = 4           # in_feats == input sequence length -> blocks = 1
C_IN = 1           # in_channels
HID = 32           # n_hidden
SKIP_CH = 256      # skip_channels
END_CH = 512       # end_channels
OUT_FEATS = 12     # out_feats
ADJ_EMBED = 10
KERNEL = 2
BLOCKS = 1         # because in_feats == 4
LAYERS = 2
EPS_BN = 1e-5

# mirror the receptive-field / dilation schedule from GCN_ST.__init__
RECEPTIVE_FIELD = 1
DILATIONS = []
for _b in range(BLOCKS):
    _additional_scope = KERNEL - 1
    _d = 1
    for _i in range(LAYERS):
        DILATIONS.append(_d)
        _d *= 2
        RECEPTIVE_FIELD += _additional_scope
        _additional_scope *= 2

T_START = max(T_IN, RECEPTIVE_FIELD)            # time length after left padding
T_FINAL = T_START - sum(DILATIONS)              # time length entering the head (== 1 here)

_VMEM = pl.BlockSpec(memory_space=pltpu.MemorySpace.VMEM)


# ----------------------------- fused Pallas kernel ---------------------------
def _rows(mat, starts, length):
    """Take static [start, start+length) row blocks of a 2-D value and stack them."""
    parts = [mat[s:s + length, :] for s in starts]
    return parts[0] if len(parts) == 1 else jnp.concatenate(parts, axis=0)


def _gcn_st_fused_kernel(x_ref, adj_t_ref, nv2t_ref, nv1t_ref,
                         w_start_ref, b_start_ref,
                         wfg_ref, bfg_ref,
                         ws_ref, bs_ref, wgc_ref, bgc_ref,
                         gamma_ref, beta_ref,
                         w_end1_ref, b_end1_ref, w_end2_ref, b_end2_ref,
                         out_ref):
    f32 = jnp.float32

    # ---- _update_edge: adaptive adjacency + GraphConv('both') degree norms ----
    # Built directly in transposed (aggregation) form:
    #   a_agg[v, u] = norm_out(u) * edge_weight(u -> v) * norm_in(v)
    # so aggregation over in-neighbours is a plain left matmul a_agg @ z.
    adj_t = adj_t_ref[...]                                    # adj_t[v, u] = adj[u, v]
    lt = jnp.dot(nv2t_ref[...], nv1t_ref[...],
                 preferred_element_type=f32)                  # lt[v, u] = (n1@n2)[u, v]
    lt = jnp.maximum(lt, 0.0) + (1.0 - adj_t) * (-1e9)
    m = jnp.max(lt, axis=0, keepdims=True)                    # softmax over v (dim=1 of original)
    e = jnp.exp(lt - m)
    soft_t = e / jnp.sum(e, axis=0, keepdims=True)
    w_t = adj_t * (1.0 + soft_t)                              # newadj on edges (transposed)
    outdeg = jnp.maximum(jnp.sum(adj_t, axis=0, keepdims=True), 1.0)   # (1, N) indexed by u
    indeg = jnp.maximum(jnp.sum(adj_t, axis=1, keepdims=True), 1.0)    # (N, 1) indexed by v
    a_agg = w_t * jax.lax.rsqrt(outdeg) * jax.lax.rsqrt(indeg)         # (N, N)

    # ---- start_conv (1x1 conv, C_in == 1 -> broadcast multiply-add) ----------
    h = x_ref[...] * w_start_ref[...] + b_start_ref[...]      # (B*T*N, HID), rows (b, t, n)
    t_cur = T_START

    # ---- stacked GCNLayer_ST layers ------------------------------------------
    skip = None
    n_layers = len(DILATIONS)
    for l, dil in enumerate(DILATIONS):
        is_last = (l == n_layers - 1)
        t_out = t_cur - dil
        # After the last layer h is discarded (skip_option head), so the last
        # layer only has to produce the T_FINAL tail time steps for the skip.
        t_eff = T_FINAL if is_last else t_out

        # dilated (1,2) temporal conv taps for output times [t_out - t_eff, t_out):
        #   x0 = input times [t_out - t_eff, t_out), x1 = [t_cur - t_eff, t_cur)
        x0 = _rows(h, [b * t_cur * N + (t_out - t_eff) * N for b in range(B)], t_eff * N)
        x1 = _rows(h, [b * t_cur * N + (t_cur - t_eff) * N for b in range(B)], t_eff * N)

        # fused filter+gate conv: columns [0,HID) = filter, [HID,2*HID) = gate
        # (gate weights/bias pre-scaled by 0.5 host-side so one tanh serves both:
        #  sigmoid(x) = 0.5*tanh(0.5*x) + 0.5).
        act = jnp.tanh(jnp.dot(x0, wfg_ref[l, 0], preferred_element_type=f32)
                       + jnp.dot(x1, wfg_ref[l, 1], preferred_element_type=f32)
                       + bfg_ref[l])
        z = act[:, :HID] * (0.5 * act[:, HID:] + 0.5)         # tanh(filter) * sigmoid(gate)

        # skip branch: only the final T_FINAL time steps ever reach the head,
        # so the 1x1 skip conv is evaluated on those rows only.
        if t_eff == T_FINAL:
            z_tail = z
        else:
            z_tail = _rows(z, [b * t_eff * N + (t_eff - T_FINAL) * N for b in range(B)],
                           T_FINAL * N)
        s = jnp.dot(z_tail, ws_ref[l], preferred_element_type=f32) + bs_ref[l]
        skip = s if skip is None else skip + s

        if not is_last:
            # graph conv: channel matmul first (commutes with node aggregation),
            # then aggregate nodes per (batch, time) with the shared a_agg.
            gz = jnp.dot(z, wgc_ref[l], preferred_element_type=f32)
            agg = jnp.concatenate(
                [jnp.dot(a_agg, gz[bt * N:(bt + 1) * N, :], preferred_element_type=f32)
                 for bt in range(B * t_out)], axis=0)
            gc = jnp.maximum(agg + bgc_ref[l], 0.0)           # GraphConv bias + ReLU

            # residual add: last t_out time steps of the layer input (== x1)
            hres = gc + x1

            # BatchNorm2d with training-mode batch statistics over (B, N, t_out)
            mean = jnp.mean(hres, axis=0, keepdims=True)
            var = jnp.mean((hres - mean) ** 2, axis=0, keepdims=True)
            h = (hres - mean) * jax.lax.rsqrt(var + EPS_BN) * gamma_ref[l] + beta_ref[l]

            t_cur = t_out

    # ---- head: relu(skip) -> relu(end_conv_1) -> end_conv_2 -------------------
    # skip already holds only the final T_FINAL time steps -> rows == B*T_FINAL*N
    sk = jnp.maximum(skip, 0.0).astype(jnp.bfloat16)
    e1 = jnp.maximum(
        jnp.dot(sk, w_end1_ref[...], preferred_element_type=f32) + b_end1_ref[...], 0.0)
    e2 = (jnp.dot(e1.astype(jnp.bfloat16), w_end2_ref[...], preferred_element_type=f32)
          + b_end2_ref[...])
    out_ref[...] = e2                                         # (B*T_FINAL*N, OUT_FEATS)


# ----------------------------- wrapper (glue) --------------------------------
def gcn_st_forward(features, adj, params):
    """features: (B, T_IN, N, C_IN) exactly as handed to GCN_ST.forward (pre-transpose)."""
    x = features.astype(jnp.float32)
    t_in = x.shape[1]
    if t_in < RECEPTIVE_FIELD:                    # F.pad on the left of the time axis
        x = jnp.pad(x, ((0, 0), (RECEPTIVE_FIELD - t_in, 0), (0, 0), (0, 0)))
    x2d = x.reshape(B * T_START * N, C_IN)                    # rows ordered (b, t, n)

    # host-side transposes so the kernel builds a_agg = wn.T directly (no in-kernel transpose)
    adj_t = jnp.transpose(adj)                    # adj_t[v, u] = adj[u, v]
    nv1t = jnp.transpose(params['nodevec1'])      # (ADJ_EMBED, N)
    nv2t = jnp.transpose(params['nodevec2'])      # (N, ADJ_EMBED)

    # pack filter + gate conv taps into one weight (gate half scaled by 0.5 so a
    # single tanh inside the kernel serves both activations)
    wfg = jnp.concatenate([params['wf'], 0.5 * params['wg']], axis=-1)   # (L, 2, HID, 2*HID)
    bfg = jnp.concatenate([params['bf'], 0.5 * params['bg']], axis=-1)   # (L, 1, 2*HID)

    final_rows = B * T_FINAL * N
    out2d = pl.pallas_call(
        _gcn_st_fused_kernel,
        out_shape=jax.ShapeDtypeStruct((final_rows, OUT_FEATS), jnp.float32),
        in_specs=[_VMEM] * 18,
        out_specs=_VMEM,
    )(x2d, adj_t, nv2t, nv1t,
      params['w_start'], params['b_start'],
      wfg, bfg,
      params['ws'], params['bs'], params['wgc'], params['bgc'],
      params['gamma'], params['beta'],
      params['w_end1'].astype(jnp.bfloat16), params['b_end1'],
      params['w_end2'].astype(jnp.bfloat16), params['b_end2'])

    # out2d rows are (b, n) (T_FINAL == 1); torch returns (B, OUT_FEATS, N) after squeeze(-1)
    return jnp.transpose(out2d.reshape(B, N, OUT_FEATS), (0, 2, 1))


# ----------------------------- parameter init --------------------------------
def init_params(key):
    keys = jax.random.split(key, 24)
    it = iter(keys)

    def nrm(shape, scale=0.1):
        return scale * jax.random.normal(next(it), shape, dtype=jnp.float32)

    L = len(DILATIONS)
    params = {
        'w_start': nrm((C_IN, HID)), 'b_start': nrm((1, HID)),
        'nodevec1': jax.random.normal(next(it), (N, ADJ_EMBED), dtype=jnp.float32),
        'nodevec2': jax.random.normal(next(it), (ADJ_EMBED, N), dtype=jnp.float32),
        'w_end1': nrm((SKIP_CH, END_CH)), 'b_end1': nrm((1, END_CH)),
        'w_end2': nrm((END_CH, OUT_FEATS)), 'b_end2': nrm((1, OUT_FEATS)),
        # per-layer params stacked along a leading layer axis
        'wf': nrm((L, 2, HID, HID)), 'bf': nrm((L, 1, HID)),      # filter (1,2) conv taps
        'wg': nrm((L, 2, HID, HID)), 'bg': nrm((L, 1, HID)),      # gate   (1,2) conv taps
        'ws': nrm((L, HID, SKIP_CH)), 'bs': nrm((L, 1, SKIP_CH)), # skip 1x1 conv
        'wgc': nrm((L, HID, HID)), 'bgc': nrm((L, 1, HID)),       # GraphConv weight/bias
        'gamma': jnp.ones((L, 1, HID), jnp.float32),
        'beta': jnp.zeros((L, 1, HID), jnp.float32),
    }
    return params


# ----------------------------------- main -------------------------------------
if __name__ == "__main__":
    key = jax.random.PRNGKey(0)
    pkey, xkey = jax.random.split(key)
    params = init_params(pkey)

    # deterministic ring graph with self-loops (every node has >=1 in/out edge)
    adj_np = np.eye(N, dtype=np.float32)
    for u in range(N):
        adj_np[u, (u + 1) % N] = 1.0
        adj_np[(u + 1) % N, u] = 1.0
    adj = jnp.asarray(adj_np)

    # features as handed to GCN_ST.forward: (B, T=in_feats, N=num_nodes, C_in)
    features = jax.random.normal(xkey, (B, T_IN, N, C_IN), dtype=jnp.float32)

    out = jax.jit(gcn_st_forward)(features, adj, params)
    out = jax.block_until_ready(out)
    assert out.shape == (B, OUT_FEATS, N), out.shape
    assert bool(jnp.all(jnp.isfinite(out)))
    print("KERNEL_OK")
</pallas_src>

<mosaic_0001>
module attributes {stable_mosaic.version = 11 : i64} {
  func.func @_gcn_st_fused_kernel(%arg0: memref<64x1xf32, #tpu.memory_space<vmem>>, %arg1: memref<8x8xf32, #tpu.memory_space<vmem>>, %arg2: memref<8x10xf32, #tpu.memory_space<vmem>>, %arg3: memref<10x8xf32, #tpu.memory_space<vmem>>, %arg4: memref<1x32xf32, #tpu.memory_space<vmem>>, %arg5: memref<1x32xf32, #tpu.memory_space<vmem>>, %arg6: memref<2x2x32x64xf32, #tpu.memory_space<vmem>>, %arg7: memref<2x1x64xf32, #tpu.memory_space<vmem>>, %arg8: memref<2x32x256xf32, #tpu.memory_space<vmem>>, %arg9: memref<2x1x256xf32, #tpu.memory_space<vmem>>, %arg10: memref<2x32x32xf32, #tpu.memory_space<vmem>>, %arg11: memref<2x1x32xf32, #tpu.memory_space<vmem>>, %arg12: memref<2x1x32xf32, #tpu.memory_space<vmem>>, %arg13: memref<2x1x32xf32, #tpu.memory_space<vmem>>, %arg14: memref<256x512xbf16, #tpu.memory_space<vmem>>, %arg15: memref<1x512xf32, #tpu.memory_space<vmem>>, %arg16: memref<512x12xbf16, #tpu.memory_space<vmem>>, %arg17: memref<1x12xf32, #tpu.memory_space<vmem>>, %arg18: memref<16x12xf32, #tpu.memory_space<vmem>>) attributes {dimension_semantics = [], scalar_prefetch = 0 : i64, scratch_operands = 0 : i64, tpu.core_type = #tpu.core_type<tc>} {
    %c0 = arith.constant 0 : index
    %c0_0 = arith.constant 0 : index
    %0 = vector.load %arg1[%c0, %c0_0] : memref<8x8xf32, #tpu.memory_space<vmem>>, vector<8x8xf32>
    %c0_1 = arith.constant 0 : index
    %c0_2 = arith.constant 0 : index
    %1 = vector.load %arg2[%c0_1, %c0_2] : memref<8x10xf32, #tpu.memory_space<vmem>>, vector<8x10xf32>
    %c0_3 = arith.constant 0 : index
    %c0_4 = arith.constant 0 : index
    %2 = vector.load %arg3[%c0_3, %c0_4] : memref<10x8xf32, #tpu.memory_space<vmem>>, vector<10x8xf32>
    %cst = arith.constant dense<0.000000e+00> : vector<8x8xf32>
    %3 = tpu.matmul %1, %2, %cst {dimension_numbers = #tpu.dot_dimension_numbers<[1], [0], [0], [1], [0, 0, 1, 1], [], []>} : vector<8x10xf32>, vector<10x8xf32>, vector<8x8xf32> -> vector<8x8xf32>
    %cst_5 = arith.constant 0.000000e+00 : f32
    %4 = vector.broadcast %cst_5 : f32 to vector<8x8xf32>
    %5 = arith.maximumf %3, %4 : vector<8x8xf32>
    %cst_6 = arith.constant 1.000000e+00 : f32
    %6 = vector.broadcast %cst_6 : f32 to vector<8x8xf32>
    %7 = arith.subf %6, %0 : vector<8x8xf32>
    %cst_7 = arith.constant -1.000000e+09 : f32
    %8 = vector.broadcast %cst_7 : f32 to vector<8x8xf32>
    %9 = arith.mulf %7, %8 : vector<8x8xf32>
    %10 = arith.addf %5, %9 : vector<8x8xf32>
    %cst_8 = arith.constant dense<0xFF800000> : vector<8xf32>
    %11 = vector.multi_reduction <maximumf>, %10, %cst_8 [0] : vector<8x8xf32> to vector<8xf32>
    %12 = vector.shape_cast %11 : vector<8xf32> to vector<1x8xf32>
    %13 = vector.broadcast %12 : vector<1x8xf32> to vector<8x8xf32>
    %14 = arith.subf %10, %13 : vector<8x8xf32>
    %15 = math.exp %14 : vector<8x8xf32>
    %cst_9 = arith.constant dense<0.000000e+00> : vector<8xf32>
    %16 = vector.multi_reduction <add>, %15, %cst_9 [0] : vector<8x8xf32> to vector<8xf32>
    %17 = vector.shape_cast %16 : vector<8xf32> to vector<1x8xf32>
    %18 = vector.broadcast %17 : vector<1x8xf32> to vector<8x8xf32>
    %19 = arith.divf %15, %18 : vector<8x8xf32>
    %cst_10 = arith.constant 1.000000e+00 : f32
    %20 = vector.broadcast %cst_10 : f32 to vector<8x8xf32>
    %21 = arith.addf %20, %19 : vector<8x8xf32>
    %22 = arith.mulf %0, %21 : vector<8x8xf32>
    %cst_11 = arith.constant dense<0.000000e+00> : vector<8xf32>
    %23 = vector.multi_reduction <add>, %0, %cst_11 [0] : vector<8x8xf32> to vector<8xf32>
    %24 = vector.shape_cast %23 : vector<8xf32> to vector<1x8xf32>
    %cst_12 = arith.constant 1.000000e+00 : f32
    %25 = vector.broadcast %cst_12 : f32 to vector<1x8xf32>
    %26 = arith.maximumf %24, %25 : vector<1x8xf32>
    %cst_13 = arith.constant dense<0.000000e+00> : vector<8xf32>
    %27 = vector.multi_reduction <add>, %0, %cst_13 [1] : vector<8x8xf32> to vector<8xf32>
    %28 = vector.shape_cast %27 : vector<8xf32> to vector<8x1xf32>
    %cst_14 = arith.constant 1.000000e+00 : f32
    %29 = vector.broadcast %cst_14 : f32 to vector<8x1xf32>
    %30 = arith.maximumf %28, %29 : vector<8x1xf32>
    %31 = math.rsqrt %26 : vector<1x8xf32>
    %32 = vector.broadcast %31 : vector<1x8xf32> to vector<8x8xf32>
    %33 = arith.mulf %22, %32 : vector<8x8xf32>
    %34 = math.rsqrt %30 : vector<8x1xf32>
    %35 = vector.broadcast %34 : vector<8x1xf32> to vector<8x8xf32>
    %36 = arith.mulf %33, %35 : vector<8x8xf32>
    %c0_15 = arith.constant 0 : index
    %c0_16 = arith.constant 0 : index
    %37 = vector.load %arg0[%c0_15, %c0_16] : memref<64x1xf32, #tpu.memory_space<vmem>>, vector<64x1xf32>
    %c0_17 = arith.constant 0 : index
    %c0_18 = arith.constant 0 : index
    %38 = vector.load %arg4[%c0_17, %c0_18] : memref<1x32xf32, #tpu.memory_space<vmem>>, vector<1x32xf32>
    %39 = vector.broadcast %37 : vector<64x1xf32> to vector<64x32xf32>
    %40 = vector.broadcast %38 : vector<1x32xf32> to vector<64x32xf32>
    %41 = arith.mulf %39, %40 : vector<64x32xf32>
    %c0_19 = arith.constant 0 : index
    %c0_20 = arith.constant 0 : index
    %42 = vector.load %arg5[%c0_19, %c0_20] : memref<1x32xf32, #tpu.memory_space<vmem>>, vector<1x32xf32>
    %43 = vector.broadcast %42 : vector<1x32xf32> to vector<64x32xf32>
    %44 = arith.addf %41, %43 : vector<64x32xf32>
    %45 = vector.extract_strided_slice %44 {offsets = [0, 0], sizes = [24, 32], strides = [1, 1]} : vector<64x32xf32> to vector<24x32xf32>
    %46 = vector.extract_strided_slice %44 {offsets = [32, 0], sizes = [24, 32], strides = [1, 1]} : vector<64x32xf32> to vector<24x32xf32>
    %47 = tpu.concatenate %45, %46 in 0 : vector<24x32xf32>, vector<24x32xf32> -> vector<48x32xf32>
    %48 = vector.extract_strided_slice %44 {offsets = [8, 0], sizes = [24, 32], strides = [1, 1]} : vector<64x32xf32> to vector<24x32xf32>
    %49 = vector.extract_strided_slice %44 {offsets = [40, 0], sizes = [24, 32], strides = [1, 1]} : vector<64x32xf32> to vector<24x32xf32>
    %50 = tpu.concatenate %48, %49 in 0 : vector<24x32xf32>, vector<24x32xf32> -> vector<48x32xf32>
    %c0_21 = arith.constant 0 : index
    %c0_22 = arith.constant 0 : index
    %c0_23 = arith.constant 0 : index
    %c0_24 = arith.constant 0 : index
    %51 = vector.load %arg6[%c0_21, %c0_22, %c0_23, %c0_24] : memref<2x2x32x64xf32, #tpu.memory_space<vmem>>, vector<1x1x32x64xf32>
    %52 = vector.shape_cast %51 : vector<1x1x32x64xf32> to vector<32x64xf32>
    %cst_25 = arith.constant dense<0.000000e+00> : vector<48x64xf32>
    %53 = tpu.matmul %47, %52, %cst_25 {dimension_numbers = #tpu.dot_dimension_numbers<[1], [0], [0], [1], [0, 0, 1, 1], [], []>} : vector<48x32xf32>, vector<32x64xf32>, vector<48x64xf32> -> vector<48x64xf32>
    %c0_26 = arith.constant 0 : index
    %c1 = arith.constant 1 : index
    %c0_27 = arith.constant 0 : index
    %c0_28 = arith.constant 0 : index
    %54 = vector.load %arg6[%c0_26, %c1, %c0_27, %c0_28] : memref<2x2x32x64xf32, #tpu.memory_space<vmem>>, vector<1x1x32x64xf32>
    %55 = vector.shape_cast %54 : vector<1x1x32x64xf32> to vector<32x64xf32>
    %cst_29 = arith.constant dense<0.000000e+00> : vector<48x64xf32>
    %56 = tpu.matmul %50, %55, %cst_29 {dimension_numbers = #tpu.dot_dimension_numbers<[1], [0], [0], [1], [0, 0, 1, 1], [], []>} : vector<48x32xf32>, vector<32x64xf32>, vector<48x64xf32> -> vector<48x64xf32>
    %57 = arith.addf %53, %56 : vector<48x64xf32>
    %c0_30 = arith.constant 0 : index
    %c0_31 = arith.constant 0 : index
    %c0_32 = arith.constant 0 : index
    %58 = vector.load %arg7[%c0_30, %c0_31, %c0_32] : memref<2x1x64xf32, #tpu.memory_space<vmem>>, vector<1x1x64xf32>
    %59 = vector.shape_cast %58 : vector<1x1x64xf32> to vector<1x64xf32>
    %60 = vector.broadcast %59 : vector<1x64xf32> to vector<48x64xf32>
    %61 = arith.addf %57, %60 : vector<48x64xf32>
    %62 = math.tanh %61 : vector<48x64xf32>
    %63 = vector.extract_strided_slice %62 {offsets = [0, 0], sizes = [48, 32], strides = [1, 1]} : vector<48x64xf32> to vector<48x32xf32>
    %64 = vector.extract_strided_slice %62 {offsets = [0, 32], sizes = [48, 32], strides = [1, 1]} : vector<48x64xf32> to vector<48x32xf32>
    %cst_33 = arith.constant 5.000000e-01 : f32
    %65 = vector.broadcast %cst_33 : f32 to vector<48x32xf32>
    %66 = arith.mulf %65, %64 : vector<48x32xf32>
    %cst_34 = arith.constant 5.000000e-01 : f32
    %67 = vector.broadcast %cst_34 : f32 to vector<48x32xf32>
    %68 = arith.addf %66, %67 : vector<48x32xf32>
    %69 = arith.mulf %63, %68 : vector<48x32xf32>
    %70 = vector.extract_strided_slice %69 {offsets = [16, 0], sizes = [8, 32], strides = [1, 1]} : vector<48x32xf32> to vector<8x32xf32>
    %71 = vector.extract_strided_slice %69 {offsets = [40, 0], sizes = [8, 32], strides = [1, 1]} : vector<48x32xf32> to vector<8x32xf32>
    %72 = tpu.concatenate %70, %71 in 0 : vector<8x32xf32>, vector<8x32xf32> -> vector<16x32xf32>
    %c0_35 = arith.constant 0 : index
    %c0_36 = arith.constant 0 : index
    %c0_37 = arith.constant 0 : index
    %73 = vector.load %arg8[%c0_35, %c0_36, %c0_37] : memref<2x32x256xf32, #tpu.memory_space<vmem>>, vector<1x32x256xf32>
    %74 = vector.shape_cast %73 : vector<1x32x256xf32> to vector<32x256xf32>
    %cst_38 = arith.constant dense<0.000000e+00> : vector<16x256xf32>
    %75 = tpu.matmul %72, %74, %cst_38 {dimension_numbers = #tpu.dot_dimension_numbers<[1], [0], [0], [1], [0, 0, 1, 1], [], []>} : vector<16x32xf32>, vector<32x256xf32>, vector<16x256xf32> -> vector<16x256xf32>
    %c0_39 = arith.constant 0 : index
    %c0_40 = arith.constant 0 : index
    %c0_41 = arith.constant 0 : index
    %76 = vector.load %arg9[%c0_39, %c0_40, %c0_41] : memref<2x1x256xf32, #tpu.memory_space<vmem>>, vector<1x1x256xf32>
    %77 = vector.shape_cast %76 : vector<1x1x256xf32> to vector<1x256xf32>
    %78 = vector.broadcast %77 : vector<1x256xf32> to vector<16x256xf32>
    %79 = arith.addf %75, %78 : vector<16x256xf32>
    %c0_42 = arith.constant 0 : index
    %c0_43 = arith.constant 0 : index
    %c0_44 = arith.constant 0 : index
    %80 = vector.load %arg10[%c0_42, %c0_43, %c0_44] : memref<2x32x32xf32, #tpu.memory_space<vmem>>, vector<1x32x32xf32>
    %81 = vector.shape_cast %80 : vector<1x32x32xf32> to vector<32x32xf32>
    %cst_45 = arith.constant dense<0.000000e+00> : vector<48x32xf32>
    %82 = tpu.matmul %69, %81, %cst_45 {dimension_numbers = #tpu.dot_dimension_numbers<[1], [0], [0], [1], [0, 0, 1, 1], [], []>} : vector<48x32xf32>, vector<32x32xf32>, vector<48x32xf32> -> vector<48x32xf32>
    %83 = vector.extract_strided_slice %82 {offsets = [0, 0], sizes = [8, 32], strides = [1, 1]} : vector<48x32xf32> to vector<8x32xf32>
    %cst_46 = arith.constant dense<0.000000e+00> : vector<8x32xf32>
    %84 = tpu.matmul %36, %83, %cst_46 {dimension_numbers = #tpu.dot_dimension_numbers<[1], [0], [0], [1], [0, 0, 1, 1], [], []>} : vector<8x8xf32>, vector<8x32xf32>, vector<8x32xf32> -> vector<8x32xf32>
    %85 = vector.extract_strided_slice %82 {offsets = [8, 0], sizes = [8, 32], strides = [1, 1]} : vector<48x32xf32> to vector<8x32xf32>
    %cst_47 = arith.constant dense<0.000000e+00> : vector<8x32xf32>
    %86 = tpu.matmul %36, %85, %cst_47 {dimension_numbers = #tpu.dot_dimension_numbers<[1], [0], [0], [1], [0, 0, 1, 1], [], []>} : vector<8x8xf32>, vector<8x32xf32>, vector<8x32xf32> -> vector<8x32xf32>
    %87 = vector.extract_strided_slice %82 {offsets = [16, 0], sizes = [8, 32], strides = [1, 1]} : vector<48x32xf32> to vector<8x32xf32>
    %cst_48 = arith.constant dense<0.000000e+00> : vector<8x32xf32>
    %88 = tpu.matmul %36, %87, %cst_48 {dimension_numbers = #tpu.dot_dimension_numbers<[1], [0], [0], [1], [0, 0, 1, 1], [], []>} : vector<8x8xf32>, vector<8x32xf32>, vector<8x32xf32> -> vector<8x32xf32>
    %89 = vector.extract_strided_slice %82 {offsets = [24, 0], sizes = [8, 32], strides = [1, 1]} : vector<48x32xf32> to vector<8x32xf32>
    %cst_49 = arith.constant dense<0.000000e+00> : vector<8x32xf32>
    %90 = tpu.matmul %36, %89, %cst_49 {dimension_numbers = #tpu.dot_dimension_numbers<[1], [0], [0], [1], [0, 0, 1, 1], [], []>} : vector<8x8xf32>, vector<8x32xf32>, vector<8x32xf32> -> vector<8x32xf32>
    %91 = vector.extract_strided_slice %82 {offsets = [32, 0], sizes = [8, 32], strides = [1, 1]} : vector<48x32xf32> to vector<8x32xf32>
    %cst_50 = arith.constant dense<0.000000e+00> : vector<8x32xf32>
    %92 = tpu.matmul %36, %91, %cst_50 {dimension_numbers = #tpu.dot_dimension_numbers<[1], [0], [0], [1], [0, 0, 1, 1], [], []>} : vector<8x8xf32>, vector<8x32xf32>, vector<8x32xf32> -> vector<8x32xf32>
    %93 = vector.extract_strided_slice %82 {offsets = [40, 0], sizes = [8, 32], strides = [1, 1]} : vector<48x32xf32> to vector<8x32xf32>
    %cst_51 = arith.constant dense<0.000000e+00> : vector<8x32xf32>
    %94 = tpu.matmul %36, %93, %cst_51 {dimension_numbers = #tpu.dot_dimension_numbers<[1], [0], [0], [1], [0, 0, 1, 1], [], []>} : vector<8x8xf32>, vector<8x32xf32>, vector<8x32xf32> -> vector<8x32xf32>
    %95 = tpu.concatenate %84, %86, %88, %90, %92, %94 in 0 : vector<8x32xf32>, vector<8x32xf32>, vector<8x32xf32>, vector<8x32xf32>, vector<8x32xf32>, vector<8x32xf32> -> vector<48x32xf32>
    %c0_52 = arith.constant 0 : index
    %c0_53 = arith.constant 0 : index
    %c0_54 = arith.constant 0 : index
    %96 = vector.load %arg11[%c0_52, %c0_53, %c0_54] : memref<2x1x32xf32, #tpu.memory_space<vmem>>, vector<1x1x32xf32>
    %97 = vector.shape_cast %96 : vector<1x1x32xf32> to vector<1x32xf32>
    %98 = vector.broadcast %97 : vector<1x32xf32> to vector<48x32xf32>
    %99 = arith.addf %95, %98 : vector<48x32xf32>
    %cst_55 = arith.constant 0.000000e+00 : f32
    %100 = vector.broadcast %cst_55 : f32 to vector<48x32xf32>
    %101 = arith.maximumf %99, %100 : vector<48x32xf32>
    %102 = arith.addf %101, %50 : vector<48x32xf32>
    %cst_56 = arith.constant dense<0.000000e+00> : vector<32xf32>
    %103 = vector.multi_reduction <add>, %102, %cst_56 [0] : vector<48x32xf32> to vector<32xf32>
    %104 = vector.shape_cast %103 : vector<32xf32> to vector<1x32xf32>
    %cst_57 = arith.constant 4.800000e+01 : f32
    %105 = vector.broadcast %cst_57 : f32 to vector<1x32xf32>
    %106 = arith.divf %104, %105 : vector<1x32xf32>
    %107 = vector.broadcast %106 : vector<1x32xf32> to vector<48x32xf32>
    %108 = arith.subf %102, %107 : vector<48x32xf32>
    %109 = arith.mulf %108, %108 : vector<48x32xf32>
    %cst_58 = arith.constant dense<0.000000e+00> : vector<32xf32>
    %110 = vector.multi_reduction <add>, %109, %cst_58 [0] : vector<48x32xf32> to vector<32xf32>
    %111 = vector.shape_cast %110 : vector<32xf32> to vector<1x32xf32>
    %cst_59 = arith.constant 4.800000e+01 : f32
    %112 = vector.broadcast %cst_59 : f32 to vector<1x32xf32>
    %113 = arith.divf %111, %112 : vector<1x32xf32>
    %114 = vector.broadcast %106 : vector<1x32xf32> to vector<48x32xf32>
    %115 = arith.subf %102, %114 : vector<48x32xf32>
    %cst_60 = arith.constant 9.99999974E-6 : f32
    %116 = vector.broadcast %cst_60 : f32 to vector<1x32xf32>
    %117 = arith.addf %113, %116 : vector<1x32xf32>
    %118 = math.rsqrt %117 : vector<1x32xf32>
    %119 = vector.broadcast %118 : vector<1x32xf32> to vector<48x32xf32>
    %120 = arith.mulf %115, %119 : vector<48x32xf32>
    %c0_61 = arith.constant 0 : index
    %c0_62 = arith.constant 0 : index
    %c0_63 = arith.constant 0 : index
    %121 = vector.load %arg12[%c0_61, %c0_62, %c0_63] : memref<2x1x32xf32, #tpu.memory_space<vmem>>, vector<1x1x32xf32>
    %122 = vector.shape_cast %121 : vector<1x1x32xf32> to vector<1x32xf32>
    %123 = vector.broadcast %122 : vector<1x32xf32> to vector<48x32xf32>
    %124 = arith.mulf %120, %123 : vector<48x32xf32>
    %c0_64 = arith.constant 0 : index
    %c0_65 = arith.constant 0 : index
    %c0_66 = arith.constant 0 : index
    %125 = vector.load %arg13[%c0_64, %c0_65, %c0_66] : memref<2x1x32xf32, #tpu.memory_space<vmem>>, vector<1x1x32xf32>
    %126 = vector.shape_cast %125 : vector<1x1x32xf32> to vector<1x32xf32>
    %127 = vector.broadcast %126 : vector<1x32xf32> to vector<48x32xf32>
    %128 = arith.addf %124, %127 : vector<48x32xf32>
    %129 = vector.extract_strided_slice %128 {offsets = [0, 0], sizes = [8, 32], strides = [1, 1]} : vector<48x32xf32> to vector<8x32xf32>
    %130 = vector.extract_strided_slice %128 {offsets = [24, 0], sizes = [8, 32], strides = [1, 1]} : vector<48x32xf32> to vector<8x32xf32>
    %131 = tpu.concatenate %129, %130 in 0 : vector<8x32xf32>, vector<8x32xf32> -> vector<16x32xf32>
    %132 = vector.extract_strided_slice %128 {offsets = [16, 0], sizes = [8, 32], strides = [1, 1]} : vector<48x32xf32> to vector<8x32xf32>
    %133 = vector.extract_strided_slice %128 {offsets = [40, 0], sizes = [8, 32], strides = [1, 1]} : vector<48x32xf32> to vector<8x32xf32>
    %134 = tpu.concatenate %132, %133 in 0 : vector<8x32xf32>, vector<8x32xf32> -> vector<16x32xf32>
    %c1_67 = arith.constant 1 : index
    %c0_68 = arith.constant 0 : index
    %c0_69 = arith.constant 0 : index
    %c0_70 = arith.constant 0 : index
    %135 = vector.load %arg6[%c1_67, %c0_68, %c0_69, %c0_70] : memref<2x2x32x64xf32, #tpu.memory_space<vmem>>, vector<1x1x32x64xf32>
    %136 = vector.shape_cast %135 : vector<1x1x32x64xf32> to vector<32x64xf32>
    %cst_71 = arith.constant dense<0.000000e+00> : vector<16x64xf32>
    %137 = tpu.matmul %131, %136, %cst_71 {dimension_numbers = #tpu.dot_dimension_numbers<[1], [0], [0], [1], [0, 0, 1, 1], [], []>} : vector<16x32xf32>, vector<32x64xf32>, vector<16x64xf32> -> vector<16x64xf32>
    %c1_72 = arith.constant 1 : index
    %c1_73 = arith.constant 1 : index
    %c0_74 = arith.constant 0 : index
    %c0_75 = arith.constant 0 : index
    %138 = vector.load %arg6[%c1_72, %c1_73, %c0_74, %c0_75] : memref<2x2x32x64xf32, #tpu.memory_space<vmem>>, vector<1x1x32x64xf32>
    %139 = vector.shape_cast %138 : vector<1x1x32x64xf32> to vector<32x64xf32>
    %cst_76 = arith.constant dense<0.000000e+00> : vector<16x64xf32>
    %140 = tpu.matmul %134, %139, %cst_76 {dimension_numbers = #tpu.dot_dimension_numbers<[1], [0], [0], [1], [0, 0, 1, 1], [], []>} : vector<16x32xf32>, vector<32x64xf32>, vector<16x64xf32> -> vector<16x64xf32>
    %141 = arith.addf %137, %140 : vector<16x64xf32>
    %c1_77 = arith.constant 1 : index
    %c0_78 = arith.constant 0 : index
    %c0_79 = arith.constant 0 : index
    %142 = vector.load %arg7[%c1_77, %c0_78, %c0_79] : memref<2x1x64xf32, #tpu.memory_space<vmem>>, vector<1x1x64xf32>
    %143 = vector.shape_cast %142 : vector<1x1x64xf32> to vector<1x64xf32>
    %144 = vector.broadcast %143 : vector<1x64xf32> to vector<16x64xf32>
    %145 = arith.addf %141, %144 : vector<16x64xf32>
    %146 = math.tanh %145 : vector<16x64xf32>
    %147 = vector.extract_strided_slice %146 {offsets = [0, 0], sizes = [16, 32], strides = [1, 1]} : vector<16x64xf32> to vector<16x32xf32>
    %148 = vector.extract_strided_slice %146 {offsets = [0, 32], sizes = [16, 32], strides = [1, 1]} : vector<16x64xf32> to vector<16x32xf32>
    %cst_80 = arith.constant 5.000000e-01 : f32
    %149 = vector.broadcast %cst_80 : f32 to vector<16x32xf32>
    %150 = arith.mulf %149, %148 : vector<16x32xf32>
    %cst_81 = arith.constant 5.000000e-01 : f32
    %151 = vector.broadcast %cst_81 : f32 to vector<16x32xf32>
    %152 = arith.addf %150, %151 : vector<16x32xf32>
    %153 = arith.mulf %147, %152 : vector<16x32xf32>
    %c1_82 = arith.constant 1 : index
    %c0_83 = arith.constant 0 : index
    %c0_84 = arith.constant 0 : index
    %154 = vector.load %arg8[%c1_82, %c0_83, %c0_84] : memref<2x32x256xf32, #tpu.memory_space<vmem>>, vector<1x32x256xf32>
    %155 = vector.shape_cast %154 : vector<1x32x256xf32> to vector<32x256xf32>
    %cst_85 = arith.constant dense<0.000000e+00> : vector<16x256xf32>
    %156 = tpu.matmul %153, %155, %cst_85 {dimension_numbers = #tpu.dot_dimension_numbers<[1], [0], [0], [1], [0, 0, 1, 1], [], []>} : vector<16x32xf32>, vector<32x256xf32>, vector<16x256xf32> -> vector<16x256xf32>
    %c1_86 = arith.constant 1 : index
    %c0_87 = arith.constant 0 : index
    %c0_88 = arith.constant 0 : index
    %157 = vector.load %arg9[%c1_86, %c0_87, %c0_88] : memref<2x1x256xf32, #tpu.memory_space<vmem>>, vector<1x1x256xf32>
    %158 = vector.shape_cast %157 : vector<1x1x256xf32> to vector<1x256xf32>
    %159 = vector.broadcast %158 : vector<1x256xf32> to vector<16x256xf32>
    %160 = arith.addf %156, %159 : vector<16x256xf32>
    %161 = arith.addf %79, %160 : vector<16x256xf32>
    %cst_89 = arith.constant 0.000000e+00 : f32
    %162 = vector.broadcast %cst_89 : f32 to vector<16x256xf32>
    %163 = arith.maximumf %161, %162 : vector<16x256xf32>
    %164 = arith.truncf %163 : vector<16x256xf32> to vector<16x256xbf16>
    %c0_90 = arith.constant 0 : index
    %c0_91 = arith.constant 0 : index
    %165 = vector.load %arg14[%c0_90, %c0_91] : memref<256x512xbf16, #tpu.memory_space<vmem>>, vector<256x512xbf16>
    %cst_92 = arith.constant dense<0.000000e+00> : vector<16x512xf32>
    %166 = tpu.matmul %164, %165, %cst_92 {dimension_numbers = #tpu.dot_dimension_numbers<[1], [0], [0], [1], [0, 0, 1, 1], [], []>} : vector<16x256xbf16>, vector<256x512xbf16>, vector<16x512xf32> -> vector<16x512xf32>
    %c0_93 = arith.constant 0 : index
    %c0_94 = arith.constant 0 : index
    %167 = vector.load %arg15[%c0_93, %c0_94] : memref<1x512xf32, #tpu.memory_space<vmem>>, vector<1x512xf32>
    %168 = vector.broadcast %167 : vector<1x512xf32> to vector<16x512xf32>
    %169 = arith.addf %166, %168 : vector<16x512xf32>
    %cst_95 = arith.constant 0.000000e+00 : f32
    %170 = vector.broadcast %cst_95 : f32 to vector<16x512xf32>
    %171 = arith.maximumf %169, %170 : vector<16x512xf32>
    %172 = arith.truncf %171 : vector<16x512xf32> to vector<16x512xbf16>
    %c0_96 = arith.constant 0 : index
    %c0_97 = arith.constant 0 : index
    %173 = vector.load %arg16[%c0_96, %c0_97] : memref<512x12xbf16, #tpu.memory_space<vmem>>, vector<512x12xbf16>
    %cst_98 = arith.constant dense<0.000000e+00> : vector<16x12xf32>
    %174 = tpu.matmul %172, %173, %cst_98 {dimension_numbers = #tpu.dot_dimension_numbers<[1], [0], [0], [1], [0, 0, 1, 1], [], []>} : vector<16x512xbf16>, vector<512x12xbf16>, vector<16x12xf32> -> vector<16x12xf32>
    %c0_99 = arith.constant 0 : index
    %c0_100 = arith.constant 0 : index
    %175 = vector.load %arg17[%c0_99, %c0_100] : memref<1x12xf32, #tpu.memory_space<vmem>>, vector<1x12xf32>
    %176 = vector.broadcast %175 : vector<1x12xf32> to vector<16x12xf32>
    %177 = arith.addf %174, %176 : vector<16x12xf32>
    %c0_101 = arith.constant 0 : index
    %c0_102 = arith.constant 0 : index
    %178 = vector.load %arg18[%c0_101, %c0_102] : memref<16x12xf32, #tpu.memory_space<vmem>>, vector<16x12xf32>
    tpu.vector_store %arg18[%c0_101, %c0_102], %177 {strides = array<i32>} : memref<16x12xf32, #tpu.memory_space<vmem>>, vector<16x12xf32>,
    return
  }
}

</mosaic_0001>

<llo_original>
// kernel: gcn_st_forward.1
$region0: #{gcn_st_forward.1}
  #allocation0 [shape = 'u32[]', space=smem, size = 0x4, offset = 0x4, fixed_abs, tag = 'smem constant byte address 0x4 - core index']
  #allocation1 [shape = 'u32[72,128]{1,0:T(1,128)}', space=vmem, size = 0x9000, scoped, tag = 'internal scratch']
  %s0 = inlined_call_operand.vmem [shape: f32[64,1], index: 0, kind: input, shape index: {}]
  %s1 = inlined_call_operand.vmem [shape: f32[8,8], index: 1, kind: input, shape index: {}]
  %s2 = inlined_call_operand.vmem [shape: f32[8,10], index: 2, kind: input, shape index: {}]
  %s3 = inlined_call_operand.vmem [shape: f32[10,8], index: 3, kind: input, shape index: {}]
  %s4 = inlined_call_operand.vmem [shape: f32[1,32], index: 4, kind: input, shape index: {}]
  %s5 = inlined_call_operand.vmem [shape: f32[1,32], index: 5, kind: input, shape index: {}]
  %s6 = inlined_call_operand.vmem [shape: f32[2,2,32,64], index: 6, kind: input, shape index: {}]
  %s7 = inlined_call_operand.vmem [shape: f32[2,1,64], index: 7, kind: input, shape index: {}]
  %s8 = inlined_call_operand.vmem [shape: f32[2,32,256], index: 8, kind: input, shape index: {}]
  %s9 = inlined_call_operand.vmem [shape: f32[2,1,256], index: 9, kind: input, shape index: {}]
  %s10 = inlined_call_operand.vmem [shape: f32[2,32,32], index: 10, kind: input, shape index: {}]
  %s11 = inlined_call_operand.vmem [shape: f32[2,1,32], index: 11, kind: input, shape index: {}]
  %s12 = inlined_call_operand.vmem [shape: f32[2,1,32], index: 12, kind: input, shape index: {}]
  %s13 = inlined_call_operand.vmem [shape: f32[2,1,32], index: 13, kind: input, shape index: {}]
  %s14 = inlined_call_operand.vmem [shape: bf16[256,512], index: 14, kind: input, shape index: {}]
  %s15 = inlined_call_operand.vmem [shape: f32[1,512], index: 15, kind: input, shape index: {}]
  %s16 = inlined_call_operand.vmem [shape: bf16[512,12], index: 16, kind: input, shape index: {}]
  %s17 = inlined_call_operand.vmem [shape: f32[1,12], index: 17, kind: input, shape index: {}]
  %s18 = inlined_call_operand.hbm [shape: f32[16,12], index: 18, kind: output, shape index: {}]
  %s19 = sld [smem:[#allocation0]]
  $region82: #{gcn_st_forward.1} parent=0
    _
  %s21 = ssub.s32 1, %s19
  %s22 = scalar_select 0, %s21, %s19
  $region1: #{gcn_st_forward.1} parent=0
    #allocation2 [shape = 'u8[8192]{0}', space=vmem, size = 0x2000, scoped, tag = 'output window, operand 0, single buffered']
    #allocation3 [shape = 's32[1]{0}', space=sflag, size = 0x4, scoped, tag = 'scoped memory for gcn_st_forward.1']
    %23 = vsyncpa [#allocation3], 0
    // Predicated region
    $region2: #{gcn_st_forward.1} parent=1 // pred_check
      _
    $region3: #{gcn_st_forward.1} parent=1 // pred_check_branch
      %25 = sbr.rel (0) target = $region5
    $region4: #{gcn_st_forward.1} parent=1 // pred_region
      _
    $region5: #{gcn_st_forward.1} parent=1 // pred_fallthru
      _
    // Predicated region
    $region6: #{gcn_st_forward.1} parent=1 // pred_check
      _
    $region7: #{gcn_st_forward.1} parent=1 // pred_check_branch
      %27 = sbr.rel (0) target = $region9
    $region8: #{gcn_st_forward.1} parent=1 // pred_region
      _
    $region9: #{gcn_st_forward.1} parent=1 // pred_fallthru
      _
    // Predicated region
    $region10: #{gcn_st_forward.1} parent=1 // pred_check
      _
    $region11: #{gcn_st_forward.1} parent=1 // pred_check_branch
      %29 = sbr.rel (0) target = $region13
    $region12: #{gcn_st_forward.1} parent=1 // pred_region
      _
    $region13: #{gcn_st_forward.1} parent=1 // pred_fallthru
      _
    // Predicated region
    $region14: #{gcn_st_forward.1} parent=1 // pred_check
      _
    $region15: #{gcn_st_forward.1} parent=1 // pred_check_branch
      %31 = sbr.rel (0) target = $region17
    $region16: #{gcn_st_forward.1} parent=1 // pred_region
      _
    $region17: #{gcn_st_forward.1} parent=1 // pred_fallthru
      _
    // Predicated region
    $region18: #{gcn_st_forward.1} parent=1 // pred_check
      _
    $region19: #{gcn_st_forward.1} parent=1 // pred_check_branch
      %33 = sbr.rel (0) target = $region21
    $region20: #{gcn_st_forward.1} parent=1 // pred_region
      _
    $region21: #{gcn_st_forward.1} parent=1 // pred_fallthru
      _
    // Predicated region
    $region22: #{gcn_st_forward.1} parent=1 // pred_check
      _
    $region23: #{gcn_st_forward.1} parent=1 // pred_check_branch
      %35 = sbr.rel (0) target = $region25
    $region24: #{gcn_st_forward.1} parent=1 // pred_region
      _
    $region25: #{gcn_st_forward.1} parent=1 // pred_fallthru
      _
    // Predicated region
    $region26: #{gcn_st_forward.1} parent=1 // pred_check
      _
    $region27: #{gcn_st_forward.1} parent=1 // pred_check_branch
      %37 = sbr.rel (0) target = $region29
    $region28: #{gcn_st_forward.1} parent=1 // pred_region
      _
    $region29: #{gcn_st_forward.1} parent=1 // pred_fallthru
      _
    // Predicated region
    $region30: #{gcn_st_forward.1} parent=1 // pred_check
      _
    $region31: #{gcn_st_forward.1} parent=1 // pred_check_branch
      %39 = sbr.rel (0) target = $region33
    $region32: #{gcn_st_forward.1} parent=1 // pred_region
      _
    $region33: #{gcn_st_forward.1} parent=1 // pred_fallthru
      _
    // Predicated region
    $region34: #{gcn_st_forward.1} parent=1 // pred_check
      _
    $region35: #{gcn_st_forward.1} parent=1 // pred_check_branch
      %41 = sbr.rel (0) target = $region37
    $region36: #{gcn_st_forward.1} parent=1 // pred_region
      _
    $region37: #{gcn_st_forward.1} parent=1 // pred_fallthru
      _
    // Predicated region
    $region38: #{gcn_st_forward.1} parent=1 // pred_check
      _
    $region39: #{gcn_st_forward.1} parent=1 // pred_check_branch
      %43 = sbr.rel (0) target = $region41
    $region40: #{gcn_st_forward.1} parent=1 // pred_region
      _
    $region41: #{gcn_st_forward.1} parent=1 // pred_fallthru
      _
    // Predicated region
    $region42: #{gcn_st_forward.1} parent=1 // pred_check
      _
    $region43: #{gcn_st_forward.1} parent=1 // pred_check_branch
      %45 = sbr.rel (0) target = $region45
    $region44: #{gcn_st_forward.1} parent=1 // pred_region
      _
    $region45: #{gcn_st_forward.1} parent=1 // pred_fallthru
      _
    // Predicated region
    $region46: #{gcn_st_forward.1} parent=1 // pred_check
      _
    $region47: #{gcn_st_forward.1} parent=1 // pred_check_branch
      %47 = sbr.rel (0) target = $region49
    $region48: #{gcn_st_forward.1} parent=1 // pred_region
      _
    $region49: #{gcn_st_forward.1} parent=1 // pred_fallthru
      _
    // Predicated region
    $region50: #{gcn_st_forward.1} parent=1 // pred_check
      _
    $region51: #{gcn_st_forward.1} parent=1 // pred_check_branch
      %49 = sbr.rel (0) target = $region53
    $region52: #{gcn_st_forward.1} parent=1 // pred_region
      _
    $region53: #{gcn_st_forward.1} parent=1 // pred_fallthru
      _
    // Predicated region
    $region54: #{gcn_st_forward.1} parent=1 // pred_check
      _
    $region55: #{gcn_st_forward.1} parent=1 // pred_check_branch
      %51 = sbr.rel (0) target = $region57
    $region56: #{gcn_st_forward.1} parent=1 // pred_region
      _
    $region57: #{gcn_st_forward.1} parent=1 // pred_fallthru
      _
    // Predicated region
    $region58: #{gcn_st_forward.1} parent=1 // pred_check
      _
    $region59: #{gcn_st_forward.1} parent=1 // pred_check_branch
      %53 = sbr.rel (0) target = $region61
    $region60: #{gcn_st_forward.1} parent=1 // pred_region
      _
    $region61: #{gcn_st_forward.1} parent=1 // pred_fallthru
      _
    // Predicated region
    $region62: #{gcn_st_forward.1} parent=1 // pred_check
      _
    $region63: #{gcn_st_forward.1} parent=1 // pred_check_branch
      %55 = sbr.rel (0) target = $region65
    $region64: #{gcn_st_forward.1} parent=1 // pred_region
      _
    $region65: #{gcn_st_forward.1} parent=1 // pred_fallthru
      _
    // Predicated region
    $region66: #{gcn_st_forward.1} parent=1 // pred_check
      _
    $region67: #{gcn_st_forward.1} parent=1 // pred_check_branch
      %57 = sbr.rel (0) target = $region69
    $region68: #{gcn_st_forward.1} parent=1 // pred_region
      _
    $region69: #{gcn_st_forward.1} parent=1 // pred_fallthru
      _
    // Predicated region
    $region70: #{gcn_st_forward.1} parent=1 // pred_check
      _
    $region71: #{gcn_st_forward.1} parent=1 // pred_check_branch
      %59 = sbr.rel (0) target = $region73
    $region72: #{gcn_st_forward.1} parent=1 // pred_region
      _
    $region73: #{gcn_st_forward.1} parent=1 // pred_fallthru
      _
    %v60 = vld [vmem:[%s1] sm:$0xff]
    %v61 = vld [vmem:[%s2] sm:$0xff]
    %v62 = vld [vmem:[%s3] sm:$0xff]
    %v63 = vld [vmem:[%s3 + $0x8] sm:$0x3]
    %vm64 = vcmask 80896
    %v66 = vsel %vm64, %v61, 0
    %vm68 = vcmask 1041408
    %v70 = vsel %vm68, %v63, 0
    %72 = vmatpush.msra.mxu0 0.0
    %73 = vmatpush.msra.mxu0 0.0
    %74 = vmatpush.msra.mxu0 0.0
    %75 = vmatpush.msra.mxu0 0.0
    %76 = vmatpush.msra.mxu0 0.0
    %77 = vmatpush.msra.mxu0 0.0
    %78 = vmatpush.msra.mxu0 0.0
    %79 = vmatpush.msra.mxu0 0.0
    %80 = vmatpush.msra.mxu0 0.0
    %81 = vmatpush.msra.mxu0 0.0
    %82 = vmatpush.msra.mxu0 0.0
    %83 = vmatpush.msra.mxu0 0.0
    %84 = vmatpush.msra.mxu0 0.0
    %85 = vmatpush.msra.mxu0 0.0
    %86 = vmatpush.msra.mxu0 %v70
    %87 = vmatpush.msra.mxu0 %v62
    %88 = vmatmul.f32.gmra.mxu0 %v66
    %v89 = vpop.f32.mrf.mxu0
    %v90 = vadd.f32 0.0, %v89
    %91 = vdwg.mxu0
    %v92 = vmax.f32 %v90, 0.0
    %v93 = vsub.f32 1.0, %v60
    %v94 = vmul.f32 %v93, -1e+09
    %v95 = vadd.f32 %v92, %v94
    %vm96 = vcmask 64512
    %v97 = vsel %vm96, %v95, -inf
    %v98 = vrot.slane %v97, 4
    %v99 = vmax.f32 %v97, %v98
    %v100 = vrot.slane %v99, 2
    %v101 = vmax.f32 %v99, %v100
    %v102 = vrot.slane %v101, 1
    %v103 = vmax.f32 %v101, %v102
    %v104 = vsub.f32 %v95, %v103
    %v105 = vmul.f32 %v104, 1.442695
    %v106 = vpow.pop %v105
    %v107 = vsel %vm96, %v106, 0.0
    %v108 = vrot.slane %v107, 4
    %v109 = vadd.f32 %v107, %v108
    %v110 = vrot.slane %v109, 2
    %v111 = vadd.f32 %v109, %v110
    %v112 = vrot.slane %v111, 1
    %v113 = vadd.f32 %v111, %v112
    %v114 = vrcp.pop %v113
    %v115 = vmul.f32 %v113, %v114
    %v116 = vsub.f32 1.0, %v115
    %v117 = vmul.f32 %v114, %v116
    %v118 = vadd.f32 %v114, %v117
    %vm119 = vweird.f32 %v113
    %vm120 = vweird.f32 %v114
    %vm121 = vmor %vm119, %vm120
    %v122 = vsel %vm121, %v114, %v118
    %v123 = vand.u32 2147483647, %v113
    %vm124 = vcmp.eq.f32.partialorder %v123, 8.507059e+37
    %v125 = vand.u32 %v113, 2147483648
    %v126 = vor.u32 1.1754944e-38, %v125
    %v127 = vsel %vm124, %v126, %v122
    %v128 = vmul.f32 %v106, %v127
    %v129 = vadd.f32 %v128, 1.0
    %v130 = vmul.f32 %v60, %v129
    %v131 = vsel %vm96, %v60, 0.0
    %v132 = vrot.slane %v131, 4
    %v133 = vadd.f32 %v131, %v132
    %v134 = vrot.slane %v133, 2
    %v135 = vadd.f32 %v133, %v134
    %v136 = vrot.slane %v135, 1
    %v137 = vadd.f32 %v135, %v136
    %v138 = vmax.f32 %v137, 1.0
    %139 = vadd.xlane.f32.xlu0 %v131
    %v140 = vpop.xlane.xlu0 %139
    %v141 = vmax.f32 %v140, 1.0
    %v142 = vrsqrt.pop %v138
    %v143 = vmul.f32 %v142, %v138
    %v144 = vmul.f32 %v143, %v142
    %v145 = vmul.f32 0.5, %v144
    %v146 = vsub.f32 1.5, %v145
    %v147 = vmul.f32 %v142, %v146
    %vm148 = vweird.f32 %v138
    %vm149 = vweird.f32 %v142
    %vm150 = vmor %vm148, %vm149
    %v151 = vsel %vm150, %v142, %v147
    %v152 = vmul.f32 %v130, %v151
    %v153 = vrsqrt.pop %v141
    %v154 = vmul.f32 %v153, %v141
    %v155 = vmul.f32 %v154, %v153
    %v156 = vmul.f32 0.5, %v155
    %v157 = vsub.f32 1.5, %v156
    %v158 = vmul.f32 %v153, %v157
    %vm159 = vweird.f32 %v141
    %vm160 = vweird.f32 %v153
    %vm161 = vmor %vm159, %vm160
    %v162 = vsel %vm161, %v153, %v158
    %v163 = vmul.f32 %v152, %v162
    %v164 = vld [vmem:[%s0] sm:$0xff]
    %v165 = vld [vmem:[%s0 + $0x8] sm:$0xff]
    %v166 = vld [vmem:[%s0 + $0x10] sm:$0xff]
    %v167 = vld [vmem:[%s0 + $0x18] sm:$0xff]
    %v168 = vld [vmem:[%s0 + $0x20] sm:$0xff]
    %v169 = vld [vmem:[%s0 + $0x28] sm:$0xff]
    %v170 = vld [vmem:[%s0 + $0x30] sm:$0xff]
    %v171 = vld [vmem:[%s0 + $0x38] sm:$0xff]
    %v172 = vld [vmem:[%s4] sm:$0x1]
    %174 = vset.pattern.permute.xlu0 0
    %175 = vperm.xlu0 %174, %v164
    %v176 = vpop.permute.xlu0 %175
    %179 = vset.pattern.permute.xlu0 0
    %180 = vperm.xlu0 %179, %v165
    %v181 = vpop.permute.xlu0 %180
    %184 = vset.pattern.permute.xlu0 0
    %185 = vperm.xlu0 %184, %v166
    %v186 = vpop.permute.xlu0 %185
    %189 = vset.pattern.permute.xlu0 0
    %190 = vperm.xlu0 %189, %v167
    %v191 = vpop.permute.xlu0 %190
    %194 = vset.pattern.permute.xlu0 0
    %195 = vperm.xlu0 %194, %v168
    %v196 = vpop.permute.xlu0 %195
    %199 = vset.pattern.permute.xlu0 0
    %200 = vperm.xlu0 %199, %v169
    %v201 = vpop.permute.xlu0 %200
    %204 = vset.pattern.permute.xlu0 0
    %205 = vperm.xlu0 %204, %v170
    %v206 = vpop.permute.xlu0 %205
    %209 = vset.pattern.permute.xlu0 0
    %210 = vperm.xlu0 %209, %v171
    %v211 = vpop.permute.xlu0 %210
    %v214 = vperm.slane %v172, 0
    %v216 = vmul.f32 %v176, %v214
    %v217 = vmul.f32 %v181, %v214
    %v218 = vmul.f32 %v186, %v214
    %v219 = vmul.f32 %v191, %v214
    %v220 = vmul.f32 %v196, %v214
    %v221 = vmul.f32 %v201, %v214
    %v222 = vmul.f32 %v206, %v214
    %v223 = vmul.f32 %v211, %v214
    %v224 = vld [vmem:[%s5] sm:$0x1]
    %v226 = vperm.slane %v224, 0
    %v228 = vadd.f32 %v216, %v226
    %v229 = vadd.f32 %v217, %v226
    %v230 = vadd.f32 %v218, %v226
    %v231 = vadd.f32 %v219, %v226
    %v232 = vadd.f32 %v220, %v226
    %v233 = vadd.f32 %v221, %v226
    %v234 = vadd.f32 %v222, %v226
    %v235 = vadd.f32 %v223, %v226
    %v236 = vld [vmem:[%s6] sm:$0xff]
    %v237 = vld [vmem:[%s6 + $0x8] sm:$0xff]
    %v238 = vld [vmem:[%s6 + $0x10] sm:$0xff]
    %v239 = vld [vmem:[%s6 + $0x18] sm:$0xff]
    %s240 = scalar_lea.vmem %s6, 32
    %v241 = vld [vmem:[%s240] sm:$0xff]
    %v242 = vld [vmem:[%s240 + $0x8] sm:$0xff]
    %v243 = vld [vmem:[%s240 + $0x10] sm:$0xff]
    %v244 = vld [vmem:[%s240 + $0x18] sm:$0xff]
    %vm245 = vcmask 261120
    %v247 = vsel %vm245, %v229, 0
    %v250 = vsel %vm245, %v230, 0
    %v253 = vsel %vm245, %v231, 0
    %v256 = vsel %vm245, %v233, 0
    %v259 = vsel %vm245, %v234, 0
    %v262 = vsel %vm245, %v235, 0
    %264 = vmatpush.msra.mxu0 0.0
    %265 = vmatpush.msra.mxu0 0.0
    %266 = vmatpush.msra.mxu0 0.0
    %267 = vmatpush.msra.mxu0 0.0
    %268 = vmatpush.msra.mxu0 0.0
    %269 = vmatpush.msra.mxu0 0.0
    %270 = vmatpush.msra.mxu0 0.0
    %271 = vmatpush.msra.mxu0 0.0
    %272 = vmatpush.msra.mxu0 0.0
    %273 = vmatpush.msra.mxu0 0.0
    %274 = vmatpush.msra.mxu0 0.0
    %275 = vmatpush.msra.mxu0 0.0
    %276 = vmatpush.msra.mxu0 %v244
    %277 = vmatpush.msra.mxu0 %v243
    %278 = vmatpush.msra.mxu0 %v242
    %279 = vmatpush.msra.mxu0 %v241
    %280 = vmatmul.f32.gmra.mxu0 %v247
    %v281 = vpop.f32.mrf.mxu0
    %v282 = vadd.f32 0.0, %v281
    %283 = vmatmul.f32.gmra.mxu0 %v250
    %v284 = vpop.f32.mrf.mxu0
    %v285 = vadd.f32 0.0, %v284
    %286 = vmatmul.f32.gmra.mxu0 %v253
    %v287 = vpop.f32.mrf.mxu0
    %v288 = vadd.f32 0.0, %v287
    %289 = vmatmul.f32.gmra.mxu0 %v256
    %v290 = vpop.f32.mrf.mxu0
    %v291 = vadd.f32 0.0, %v290
    %292 = vmatmul.f32.gmra.mxu0 %v259
    %v293 = vpop.f32.mrf.mxu0
    %v294 = vadd.f32 0.0, %v293
    %295 = vmatmul.f32.gmra.mxu0 %v262
    %v296 = vpop.f32.mrf.mxu0
    %v297 = vadd.f32 0.0, %v296
    %298 = vdwg.mxu0
    %v300 = vsel %vm245, %v228, 0
    %v303 = vsel %vm245, %v232, 0
    %305 = vmatpush.msra.mxu0 0.0
    %306 = vmatpush.msra.mxu0 0.0
    %307 = vmatpush.msra.mxu0 0.0
    %308 = vmatpush.msra.mxu0 0.0
    %309 = vmatpush.msra.mxu0 0.0
    %310 = vmatpush.msra.mxu0 0.0
    %311 = vmatpush.msra.mxu0 0.0
    %312 = vmatpush.msra.mxu0 0.0
    %313 = vmatpush.msra.mxu0 0.0
    %314 = vmatpush.msra.mxu0 0.0
    %315 = vmatpush.msra.mxu0 0.0
    %316 = vmatpush.msra.mxu0 0.0
    %317 = vmatpush.msra.mxu0 %v239
    %318 = vmatpush.msra.mxu0 %v238
    %319 = vmatpush.msra.mxu0 %v237
    %320 = vmatpush.msra.mxu0 %v236
    %321 = vmatmul.f32.gmra.mxu0 %v300
    %v322 = vpop.f32.mrf.mxu0
    %v323 = vadd.f32 %v282, %v322
    %324 = vmatmul.f32.gmra.mxu0 %v247
    %v325 = vpop.f32.mrf.mxu0
    %v326 = vadd.f32 %v285, %v325
    %327 = vmatmul.f32.gmra.mxu0 %v250
    %v328 = vpop.f32.mrf.mxu0
    %v329 = vadd.f32 %v288, %v328
    %330 = vmatmul.f32.gmra.mxu0 %v303
    %v331 = vpop.f32.mrf.mxu0
    %v332 = vadd.f32 %v291, %v331
    %333 = vmatmul.f32.gmra.mxu0 %v256
    %v334 = vpop.f32.mrf.mxu0
    %v335 = vadd.f32 %v294, %v334
    %336 = vmatmul.f32.gmra.mxu0 %v259
    %v337 = vpop.f32.mrf.mxu0
    %v338 = vadd.f32 %v297, %v337
    %339 = vdwg.mxu0
    %v340 = vld [vmem:[%s7] sm:$0x1]
    %v342 = vperm.slane %v340, 0
    %v344 = vadd.f32 %v323, %v342
    %v345 = vadd.f32 %v326, %v342
    %v346 = vadd.f32 %v329, %v342
    %v347 = vadd.f32 %v332, %v342
    %v348 = vadd.f32 %v335, %v342
    %v349 = vadd.f32 %v338, %v342
    %v350 = vtanh.pop %v344
    %v351 = vtanh.pop %v345
    %v352 = vtanh.pop %v346
    %v353 = vtanh.pop %v347
    %v354 = vtanh.pop %v348
    %v355 = vtanh.pop %v349
    %v356 = vmul.f32 %v350, 0.5
    %v357 = vmul.f32 %v351, 0.5
    %v358 = vmul.f32 %v352, 0.5
    %v359 = vmul.f32 %v353, 0.5
    %v360 = vmul.f32 %v354, 0.5
    %v361 = vmul.f32 %v355, 0.5
    %v362 = vadd.f32 %v356, 0.5
    %v363 = vadd.f32 %v357, 0.5
    %v364 = vadd.f32 %v358, 0.5
    %v365 = vadd.f32 %v359, 0.5
    %v366 = vadd.f32 %v360, 0.5
    %v367 = vadd.f32 %v361, 0.5
    %374 = vrot.lane.b32.xlu0 %v362, 96
    %v375 = vpop.permute.xlu0 %374
    %376 = vrot.lane.b32.xlu0 %v363, 96
    %v377 = vpop.permute.xlu0 %376
    %378 = vrot.lane.b32.xlu0 %v364, 96
    %v379 = vpop.permute.xlu0 %378
    %380 = vrot.lane.b32.xlu0 %v365, 96
    %v381 = vpop.permute.xlu0 %380
    %382 = vrot.lane.b32.xlu0 %v366, 96
    %v383 = vpop.permute.xlu0 %382
    %384 = vrot.lane.b32.xlu0 %v367, 96
    %v385 = vpop.permute.xlu0 %384
    %v392 = vmul.f32 %v350, %v375
    %v393 = vmul.f32 %v351, %v377
    %v394 = vmul.f32 %v352, %v379
    %v395 = vmul.f32 %v353, %v381
    %v396 = vmul.f32 %v354, %v383
    %v397 = vmul.f32 %v355, %v385
    %v398 = vld [vmem:[%s8] sm:$0xff]
    %v399 = vld [vmem:[%s8 + $0x8] sm:$0xff]
    %v400 = vld [vmem:[%s8 + $0x10] sm:$0xff]
    %v401 = vld [vmem:[%s8 + $0x18] sm:$0xff]
    %v402 = vld [vmem:[%s8 + $0x20] sm:$0xff]
    %v403 = vld [vmem:[%s8 + $0x28] sm:$0xff]
    %v404 = vld [vmem:[%s8 + $0x30] sm:$0xff]
    %v405 = vld [vmem:[%s8 + $0x38] sm:$0xff]
    %v406 = vld [vmem:[%s9] sm:$0x3]
    %v408 = vperm.slane %v406, 0
    %v409 = vperm.slane %v406, 1
    %v413 = vsel %vm245, %v394, 0
    %v416 = vsel %vm245, %v397, 0
    %418 = vmatpush.msra.mxu0 0.0
    %419 = vmatpush.msra.mxu0 0.0
    %420 = vmatpush.msra.mxu0 0.0
    %421 = vmatpush.msra.mxu0 0.0
    %422 = vmatpush.msra.mxu0 0.0
    %423 = vmatpush.msra.mxu0 0.0
    %424 = vmatpush.msra.mxu0 0.0
    %425 = vmatpush.msra.mxu0 0.0
    %426 = vmatpush.msra.mxu0 0.0
    %427 = vmatpush.msra.mxu0 0.0
    %428 = vmatpush.msra.mxu0 0.0
    %429 = vmatpush.msra.mxu0 0.0
    %430 = vmatpush.msra.mxu0 %v404
    %431 = vmatpush.msra.mxu0 %v402
    %432 = vmatpush.msra.mxu0 %v400
    %433 = vmatpush.msra.mxu0 %v398
    %434 = vmatmul.f32.gmra.mxu0 %v413
    %v435 = vpop.f32.mrf.mxu0
    %v436 = vadd.f32 %v408, %v435
    %437 = vmatmul.f32.gmra.mxu0 %v416
    %v438 = vpop.f32.mrf.mxu0
    %v439 = vadd.f32 %v408, %v438
    %440 = vdwg.mxu0
    %441 = vmatpush.msra.mxu0 0.0
    %442 = vmatpush.msra.mxu0 0.0
    %443 = vmatpush.msra.mxu0 0.0
    %444 = vmatpush.msra.mxu0 0.0
    %445 = vmatpush.msra.mxu0 0.0
    %446 = vmatpush.msra.mxu0 0.0
    %447 = vmatpush.msra.mxu0 0.0
    %448 = vmatpush.msra.mxu0 0.0
    %449 = vmatpush.msra.mxu0 0.0
    %450 = vmatpush.msra.mxu0 0.0
    %451 = vmatpush.msra.mxu0 0.0
    %452 = vmatpush.msra.mxu0 0.0
    %453 = vmatpush.msra.mxu0 %v405
    %454 = vmatpush.msra.mxu0 %v403
    %455 = vmatpush.msra.mxu0 %v401
    %456 = vmatpush.msra.mxu0 %v399
    %457 = vmatmul.f32.gmra.mxu0 %v413
    %v458 = vpop.f32.mrf.mxu0
    %v459 = vadd.f32 %v409, %v458
    %460 = vmatmul.f32.gmra.mxu0 %v416
    %v461 = vpop.f32.mrf.mxu0
    %v462 = vadd.f32 %v409, %v461
    %463 = vdwg.mxu0
    %v464 = vld [vmem:[%s10] sm:$0xff]
    %v465 = vld [vmem:[%s10 + $0x8] sm:$0xff]
    %v466 = vld [vmem:[%s10 + $0x10] sm:$0xff]
    %v467 = vld [vmem:[%s10 + $0x18] sm:$0xff]
    %v469 = vsel %vm245, %v392, 0
    %v472 = vsel %vm245, %v393, 0
    %v475 = vsel %vm245, %v395, 0
    %v478 = vsel %vm245, %v396, 0
    %480 = vmatpush.msra.mxu0 0.0
    %481 = vmatpush.msra.mxu0 0.0
    %482 = vmatpush.msra.mxu0 0.0
    %483 = vmatpush.msra.mxu0 0.0
    %484 = vmatpush.msra.mxu0 0.0
    %485 = vmatpush.msra.mxu0 0.0
    %486 = vmatpush.msra.mxu0 0.0
    %487 = vmatpush.msra.mxu0 0.0
    %488 = vmatpush.msra.mxu0 0.0
    %489 = vmatpush.msra.mxu0 0.0
    %490 = vmatpush.msra.mxu0 0.0
    %491 = vmatpush.msra.mxu0 0.0
    %492 = vmatpush.msra.mxu0 %v467
    %493 = vmatpush.msra.mxu0 %v466
    %494 = vmatpush.msra.mxu0 %v465
    %495 = vmatpush.msra.mxu0 %v464
    %496 = vmatmul.f32.gmra.mxu0 %v469
    %v497 = vpop.f32.mrf.mxu0
    %v498 = vadd.f32 0.0, %v497
    %499 = vmatmul.f32.gmra.mxu0 %v472
    %v500 = vpop.f32.mrf.mxu0
    %v501 = vadd.f32 0.0, %v500
    %502 = vmatmul.f32.gmra.mxu0 %v413
    %v503 = vpop.f32.mrf.mxu0
    %v504 = vadd.f32 0.0, %v503
    %505 = vmatmul.f32.gmra.mxu0 %v475
    %v506 = vpop.f32.mrf.mxu0
    %v507 = vadd.f32 0.0, %v506
    %508 = vmatmul.f32.gmra.mxu0 %v478
    %v509 = vpop.f32.mrf.mxu0
    %v510 = vadd.f32 0.0, %v509
    %511 = vmatmul.f32.gmra.mxu0 %v416
    %v512 = vpop.f32.mrf.mxu0
    %v513 = vadd.f32 0.0, %v512
    %514 = vdwg.mxu0
    %v516 = vsel %vm96, %v163, 0
    %518 = vmatpush.msra.mxu0 0.0
    %519 = vmatpush.msra.mxu0 0.0
    %520 = vmatpush.msra.mxu0 0.0
    %521 = vmatpush.msra.mxu0 0.0
    %522 = vmatpush.msra.mxu0 0.0
    %523 = vmatpush.msra.mxu0 0.0
    %524 = vmatpush.msra.mxu0 0.0
    %525 = vmatpush.msra.mxu0 0.0
    %526 = vmatpush.msra.mxu0 0.0
    %527 = vmatpush.msra.mxu0 0.0
    %528 = vmatpush.msra.mxu0 0.0
    %529 = vmatpush.msra.mxu0 0.0
    %530 = vmatpush.msra.mxu0 0.0
    %531 = vmatpush.msra.mxu0 0.0
    %532 = vmatpush.msra.mxu0 0.0
    %533 = vmatpush.msra.mxu0 %v498
    %534 = vmatmul.f32.gmra.mxu0 %v516
    %v535 = vpop.f32.mrf.mxu0
    %v536 = vadd.f32 0.0, %v535
    %537 = vdwg.mxu0
    %538 = vmatpush.msra.mxu0 0.0
    %539 = vmatpush.msra.mxu0 0.0
    %540 = vmatpush.msra.mxu0 0.0
    %541 = vmatpush.msra.mxu0 0.0
    %542 = vmatpush.msra.mxu0 0.0
    %543 = vmatpush.msra.mxu0 0.0
    %544 = vmatpush.msra.mxu0 0.0
    %545 = vmatpush.msra.mxu0 0.0
    %546 = vmatpush.msra.mxu0 0.0
    %547 = vmatpush.msra.mxu0 0.0
    %548 = vmatpush.msra.mxu0 0.0
    %549 = vmatpush.msra.mxu0 0.0
    %550 = vmatpush.msra.mxu0 0.0
    %551 = vmatpush.msra.mxu0 0.0
    %552 = vmatpush.msra.mxu0 0.0
    %553 = vmatpush.msra.mxu0 %v501
    %554 = vmatmul.f32.gmra.mxu0 %v516
    %v555 = vpop.f32.mrf.mxu0
    %v556 = vadd.f32 0.0, %v555
    %557 = vdwg.mxu0
    %558 = vmatpush.msra.mxu0 0.0
    %559 = vmatpush.msra.mxu0 0.0
    %560 = vmatpush.msra.mxu0 0.0
    %561 = vmatpush.msra.mxu0 0.0
    %562 = vmatpush.msra.mxu0 0.0
    %563 = vmatpush.msra.mxu0 0.0
    %564 = vmatpush.msra.mxu0 0.0
    %565 = vmatpush.msra.mxu0 0.0
    %566 = vmatpush.msra.mxu0 0.0
    %567 = vmatpush.msra.mxu0 0.0
    %568 = vmatpush.msra.mxu0 0.0
    %569 = vmatpush.msra.mxu0 0.0
    %570 = vmatpush.msra.mxu0 0.0
    %571 = vmatpush.msra.mxu0 0.0
    %572 = vmatpush.msra.mxu0 0.0
    %573 = vmatpush.msra.mxu0 %v504
    %574 = vmatmul.f32.gmra.mxu0 %v516
    %v575 = vpop.f32.mrf.mxu0
    %v576 = vadd.f32 0.0, %v575
    %577 = vdwg.mxu0
    %578 = vmatpush.msra.mxu0 0.0
    %579 = vmatpush.msra.mxu0 0.0
    %580 = vmatpush.msra.mxu0 0.0
    %581 = vmatpush.msra.mxu0 0.0
    %582 = vmatpush.msra.mxu0 0.0
    %583 = vmatpush.msra.mxu0 0.0
    %584 = vmatpush.msra.mxu0 0.0
    %585 = vmatpush.msra.mxu0 0.0
    %586 = vmatpush.msra.mxu0 0.0
    %587 = vmatpush.msra.mxu0 0.0
    %588 = vmatpush.msra.mxu0 0.0
    %589 = vmatpush.msra.mxu0 0.0
    %590 = vmatpush.msra.mxu0 0.0
    %591 = vmatpush.msra.mxu0 0.0
    %592 = vmatpush.msra.mxu0 0.0
    %593 = vmatpush.msra.mxu0 %v507
    %594 = vmatmul.f32.gmra.mxu0 %v516
    %v595 = vpop.f32.mrf.mxu0
    %v596 = vadd.f32 0.0, %v595
    %597 = vdwg.mxu0
    %598 = vmatpush.msra.mxu0 0.0
    %599 = vmatpush.msra.mxu0 0.0
    %600 = vmatpush.msra.mxu0 0.0
    %601 = vmatpush.msra.mxu0 0.0
    %602 = vmatpush.msra.mxu0 0.0
    %603 = vmatpush.msra.mxu0 0.0
    %604 = vmatpush.msra.mxu0 0.0
    %605 = vmatpush.msra.mxu0 0.0
    %606 = vmatpush.msra.mxu0 0.0
    %607 = vmatpush.msra.mxu0 0.0
    %608 = vmatpush.msra.mxu0 0.0
    %609 = vmatpush.msra.mxu0 0.0
    %610 = vmatpush.msra.mxu0 0.0
    %611 = vmatpush.msra.mxu0 0.0
    %612 = vmatpush.msra.mxu0 0.0
    %613 = vmatpush.msra.mxu0 %v510
    %614 = vmatmul.f32.gmra.mxu0 %v516
    %v615 = vpop.f32.mrf.mxu0
    %v616 = vadd.f32 0.0, %v615
    %617 = vdwg.mxu0
    %618 = vmatpush.msra.mxu0 0.0
    %619 = vmatpush.msra.mxu0 0.0
    %620 = vmatpush.msra.mxu0 0.0
    %621 = vmatpush.msra.mxu0 0.0
    %622 = vmatpush.msra.mxu0 0.0
    %623 = vmatpush.msra.mxu0 0.0
    %624 = vmatpush.msra.mxu0 0.0
    %625 = vmatpush.msra.mxu0 0.0
    %626 = vmatpush.msra.mxu0 0.0
    %627 = vmatpush.msra.mxu0 0.0
    %628 = vmatpush.msra.mxu0 0.0
    %629 = vmatpush.msra.mxu0 0.0
    %630 = vmatpush.msra.mxu0 0.0
    %631 = vmatpush.msra.mxu0 0.0
    %632 = vmatpush.msra.mxu0 0.0
    %633 = vmatpush.msra.mxu0 %v513
    %634 = vmatmul.f32.gmra.mxu0 %v516
    %v635 = vpop.f32.mrf.mxu0
    %v636 = vadd.f32 0.0, %v635
    %637 = vdwg.mxu0
    %v638 = vld [vmem:[%s11] sm:$0x1]
    %v640 = vperm.slane %v638, 0
    %v642 = vadd.f32 %v536, %v640
    %v643 = vadd.f32 %v556, %v640
    %v644 = vadd.f32 %v576, %v640
    %v645 = vadd.f32 %v596, %v640
    %v646 = vadd.f32 %v616, %v640
    %v647 = vadd.f32 %v636, %v640
    %v648 = vmax.f32 %v642, 0.0
    %v649 = vmax.f32 %v643, 0.0
    %v650 = vmax.f32 %v644, 0.0
    %v651 = vmax.f32 %v645, 0.0
    %v652 = vmax.f32 %v646, 0.0
    %v653 = vmax.f32 %v647, 0.0
    %v654 = vadd.f32 %v648, %v229
    %v655 = vadd.f32 %v649, %v230
    %v656 = vadd.f32 %v650, %v231
    %v657 = vadd.f32 %v651, %v233
    %v658 = vadd.f32 %v652, %v234
    %v659 = vadd.f32 %v653, %v235
    %v660 = vsel %vm245, %v654, 0.0
    %v661 = vsel %vm245, %v655, 0.0
    %v662 = vadd.f32 %v660, %v661
    %v663 = vsel %vm245, %v656, 0.0
    %v664 = vadd.f32 %v662, %v663
    %v665 = vsel %vm245, %v657, 0.0
    %v666 = vadd.f32 %v664, %v665
    %v667 = vsel %vm245, %v658, 0.0
    %v668 = vadd.f32 %v666, %v667
    %v669 = vsel %vm245, %v659, 0.0
    %v670 = vadd.f32 %v668, %v669
    %v671 = vrot.slane %v670, 4
    %v672 = vadd.f32 %v670, %v671
    %v673 = vrot.slane %v672, 2
    %v674 = vadd.f32 %v672, %v673
    %v675 = vrot.slane %v674, 1
    %v676 = vadd.f32 %v674, %v675
    %v677 = vrcp.pop 48.0
    %v678 = vmul.f32 48.0, %v677
    %v679 = vsub.f32 1.0, %v678
    %v680 = vmul.f32 %v677, %v679
    %v681 = vadd.f32 %v677, %v680
    %vm682 = vweird.f32 %v677
    %v683 = vsel %vm682, %v677, %v681
    %v684 = vmul.f32 %v676, %v683
    %v685 = vsub.f32 %v654, %v684
    %v686 = vsub.f32 %v655, %v684
    %v687 = vsub.f32 %v656, %v684
    %v688 = vsub.f32 %v657, %v684
    %v689 = vsub.f32 %v658, %v684
    %v690 = vsub.f32 %v659, %v684
    %v691 = vmul.f32 %v685, %v685
    %v692 = vmul.f32 %v686, %v686
    %v693 = vmul.f32 %v687, %v687
    %v694 = vmul.f32 %v688, %v688
    %v695 = vmul.f32 %v689, %v689
    %v696 = vmul.f32 %v690, %v690
    %v697 = vsel %vm245, %v691, 0.0
    %v698 = vsel %vm245, %v692, 0.0
    %v699 = vadd.f32 %v697, %v698
    %v700 = vsel %vm245, %v693, 0.0
    %v701 = vadd.f32 %v699, %v700
    %v702 = vsel %vm245, %v694, 0.0
    %v703 = vadd.f32 %v701, %v702
    %v704 = vsel %vm245, %v695, 0.0
    %v705 = vadd.f32 %v703, %v704
    %v706 = vsel %vm245, %v696, 0.0
    %v707 = vadd.f32 %v705, %v706
    %v708 = vrot.slane %v707, 4
    %v709 = vadd.f32 %v707, %v708
    %v710 = vrot.slane %v709, 2
    %v711 = vadd.f32 %v709, %v710
    %v712 = vrot.slane %v711, 1
    %v713 = vadd.f32 %v711, %v712
    %v714 = vmul.f32 %v713, %v683
    %v715 = vadd.f32 %v714, 1e-05
    %v716 = vrsqrt.pop %v715
    %v717 = vmul.f32 %v716, %v715
    %v718 = vmul.f32 %v717, %v716
    %v719 = vmul.f32 0.5, %v718
    %v720 = vsub.f32 1.5, %v719
    %v721 = vmul.f32 %v716, %v720
    %vm722 = vweird.f32 %v715
    %vm723 = vweird.f32 %v716
    %vm724 = vmor %vm722, %vm723
    %v725 = vsel %vm724, %v716, %v721
    %v726 = vmul.f32 %v685, %v725
    %v727 = vmul.f32 %v687, %v725
    %v728 = vmul.f32 %v688, %v725
    %v729 = vmul.f32 %v690, %v725
    %v730 = vld [vmem:[%s12] sm:$0x1]
    %v732 = vperm.slane %v730, 0
    %v734 = vmul.f32 %v726, %v732
    %v735 = vmul.f32 %v727, %v732
    %v736 = vmul.f32 %v728, %v732
    %v737 = vmul.f32 %v729, %v732
    %v738 = vld [vmem:[%s13] sm:$0x1]
    %v740 = vperm.slane %v738, 0
    %v742 = vadd.f32 %v734, %v740
    %v743 = vadd.f32 %v735, %v740
    %v744 = vadd.f32 %v736, %v740
    %v745 = vadd.f32 %v737, %v740
    %s746 = scalar_lea.vmem %s6, 64
    %v747 = vld [vmem:[%s746] sm:$0xff]
    %v748 = vld [vmem:[%s746 + $0x8] sm:$0xff]
    %v749 = vld [vmem:[%s746 + $0x10] sm:$0xff]
    %v750 = vld [vmem:[%s746 + $0x18] sm:$0xff]
    %s751 = scalar_lea.vmem %s6, 96
    %v752 = vld [vmem:[%s751] sm:$0xff]
    %v753 = vld [vmem:[%s751 + $0x8] sm:$0xff]
    %v754 = vld [vmem:[%s751 + $0x10] sm:$0xff]
    %v755 = vld [vmem:[%s751 + $0x18] sm:$0xff]
    %v757 = vsel %vm245, %v743, 0
    %v760 = vsel %vm245, %v745, 0
    %762 = vmatpush.msra.mxu0 0.0
    %763 = vmatpush.msra.mxu0 0.0
    %764 = vmatpush.msra.mxu0 0.0
    %765 = vmatpush.msra.mxu0 0.0
    %766 = vmatpush.msra.mxu0 0.0
    %767 = vmatpush.msra.mxu0 0.0
    %768 = vmatpush.msra.mxu0 0.0
    %769 = vmatpush.msra.mxu0 0.0
    %770 = vmatpush.msra.mxu0 0.0
    %771 = vmatpush.msra.mxu0 0.0
    %772 = vmatpush.msra.mxu0 0.0
    %773 = vmatpush.msra.mxu0 0.0
    %774 = vmatpush.msra.mxu0 %v755
    %775 = vmatpush.msra.mxu0 %v754
    %776 = vmatpush.msra.mxu0 %v753
    %777 = vmatpush.msra.mxu0 %v752
    %778 = vmatmul.f32.gmra.mxu0 %v757
    %v779 = vpop.f32.mrf.mxu0
    %v780 = vadd.f32 0.0, %v779
    %781 = vmatmul.f32.gmra.mxu0 %v760
    %v782 = vpop.f32.mrf.mxu0
    %v783 = vadd.f32 0.0, %v782
    %784 = vdwg.mxu0
    %v786 = vsel %vm245, %v742, 0
    %v789 = vsel %vm245, %v744, 0
    %791 = vmatpush.msra.mxu0 0.0
    %792 = vmatpush.msra.mxu0 0.0
    %793 = vmatpush.msra.mxu0 0.0
    %794 = vmatpush.msra.mxu0 0.0
    %795 = vmatpush.msra.mxu0 0.0
    %796 = vmatpush.msra.mxu0 0.0
    %797 = vmatpush.msra.mxu0 0.0
    %798 = vmatpush.msra.mxu0 0.0
    %799 = vmatpush.msra.mxu0 0.0
    %800 = vmatpush.msra.mxu0 0.0
    %801 = vmatpush.msra.mxu0 0.0
    %802 = vmatpush.msra.mxu0 0.0
    %803 = vmatpush.msra.mxu0 %v750
    %804 = vmatpush.msra.mxu0 %v749
    %805 = vmatpush.msra.mxu0 %v748
    %806 = vmatpush.msra.mxu0 %v747
    %807 = vmatmul.f32.gmra.mxu0 %v786
    %v808 = vpop.f32.mrf.mxu0
    %v809 = vadd.f32 %v780, %v808
    %810 = vmatmul.f32.gmra.mxu0 %v789
    %v811 = vpop.f32.mrf.mxu0
    %v812 = vadd.f32 %v783, %v811
    %813 = vdwg.mxu0
    %s814 = scalar_lea.vmem %s7, 1
    %v815 = vld [vmem:[%s814] sm:$0x1]
    %v817 = vperm.slane %v815, 0
    %v819 = vadd.f32 %v809, %v817
    %v820 = vadd.f32 %v812, %v817
    %v821 = vtanh.pop %v819
    %v822 = vtanh.pop %v820
    %v823 = vmul.f32 %v821, 0.5
    %v824 = vmul.f32 %v822, 0.5
    %v825 = vadd.f32 %v823, 0.5
    %v826 = vadd.f32 %v824, 0.5
    %829 = vrot.lane.b32.xlu0 %v825, 96
    %v830 = vpop.permute.xlu0 %829
    %831 = vrot.lane.b32.xlu0 %v826, 96
    %v832 = vpop.permute.xlu0 %831
    %v835 = vmul.f32 %v821, %v830
    %v836 = vmul.f32 %v822, %v832
    %s837 = scalar_lea.vmem %s8, 64
    %v838 = vld [vmem:[%s837] sm:$0xff]
    %v839 = vld [vmem:[%s837 + $0x8] sm:$0xff]
    %v840 = vld [vmem:[%s837 + $0x10] sm:$0xff]
    %v841 = vld [vmem:[%s837 + $0x18] sm:$0xff]
    %v842 = vld [vmem:[%s837 + $0x20] sm:$0xff]
    %v843 = vld [vmem:[%s837 + $0x28] sm:$0xff]
    %v844 = vld [vmem:[%s837 + $0x30] sm:$0xff]
    %v845 = vld [vmem:[%s837 + $0x38] sm:$0xff]
    %s846 = scalar_lea.vmem %s9, 2
    %v847 = vld [vmem:[%s846] sm:$0x3]
    %v849 = vperm.slane %v847, 0
    %v850 = vperm.slane %v847, 1
    %v854 = vsel %vm245, %v835, 0
    %v857 = vsel %vm245, %v836, 0
    %859 = vmatpush.msra.mxu0 0.0
    %860 = vmatpush.msra.mxu0 0.0
    %861 = vmatpush.msra.mxu0 0.0
    %862 = vmatpush.msra.mxu0 0.0
    %863 = vmatpush.msra.mxu0 0.0
    %864 = vmatpush.msra.mxu0 0.0
    %865 = vmatpush.msra.mxu0 0.0
    %866 = vmatpush.msra.mxu0 0.0
    %867 = vmatpush.msra.mxu0 0.0
    %868 = vmatpush.msra.mxu0 0.0
    %869 = vmatpush.msra.mxu0 0.0
    %870 = vmatpush.msra.mxu0 0.0
    %871 = vmatpush.msra.mxu0 %v844
    %872 = vmatpush.msra.mxu0 %v842
    %873 = vmatpush.msra.mxu0 %v840
    %874 = vmatpush.msra.mxu0 %v838
    %875 = vmatmul.f32.gmra.mxu0 %v854
    %v876 = vpop.f32.mrf.mxu0
    %v877 = vadd.f32 %v849, %v876
    %878 = vmatmul.f32.gmra.mxu0 %v857
    %v879 = vpop.f32.mrf.mxu0
    %v880 = vadd.f32 %v849, %v879
    %881 = vdwg.mxu0
    %882 = vmatpush.msra.mxu0 0.0
    %883 = vmatpush.msra.mxu0 0.0
    %884 = vmatpush.msra.mxu0 0.0
    %885 = vmatpush.msra.mxu0 0.0
    %886 = vmatpush.msra.mxu0 0.0
    %887 = vmatpush.msra.mxu0 0.0
    %888 = vmatpush.msra.mxu0 0.0
    %889 = vmatpush.msra.mxu0 0.0
    %890 = vmatpush.msra.mxu0 0.0
    %891 = vmatpush.msra.mxu0 0.0
    %892 = vmatpush.msra.mxu0 0.0
    %893 = vmatpush.msra.mxu0 0.0
    %894 = vmatpush.msra.mxu0 %v845
    %895 = vmatpush.msra.mxu0 %v843
    %896 = vmatpush.msra.mxu0 %v841
    %897 = vmatpush.msra.mxu0 %v839
    %898 = vmatmul.f32.gmra.mxu0 %v854
    %v899 = vpop.f32.mrf.mxu0
    %v900 = vadd.f32 %v850, %v899
    %901 = vmatmul.f32.gmra.mxu0 %v857
    %v902 = vpop.f32.mrf.mxu0
    %v903 = vadd.f32 %v850, %v902
    %904 = vdwg.mxu0
    %v905 = vadd.f32 %v436, %v877
    %v906 = vadd.f32 %v459, %v900
    %v907 = vadd.f32 %v439, %v880
    %v908 = vadd.f32 %v462, %v903
    %v909 = vmax.f32 %v905, 0.0
    %v910 = vmax.f32 %v906, 0.0
    %v911 = vmax.f32 %v907, 0.0
    %v912 = vmax.f32 %v908, 0.0
    %v913 = vpack.c.bf16 %v911, %v909
    %v914 = vpack.c.bf16 %v912, %v910
    %v915 = vld [vmem:[%s14] sm:$0xff]
    %v916 = vld [vmem:[%s14 + $0x8] sm:$0xff]
    %v917 = vld [vmem:[%s14 + $0x10] sm:$0xff]
    %v918 = vld [vmem:[%s14 + $0x18] sm:$0xff]
    %v919 = vld [vmem:[%s14 + $0x20] sm:$0xff]
    %v920 = vld [vmem:[%s14 + $0x28] sm:$0xff]
    %v921 = vld [vmem:[%s14 + $0x30] sm:$0xff]
    %v922 = vld [vmem:[%s14 + $0x38] sm:$0xff]
    %v923 = vld [vmem:[%s14 + $0x40] sm:$0xff]
    %v924 = vld [vmem:[%s14 + $0x48] sm:$0xff]
    %v925 = vld [vmem:[%s14 + $0x50] sm:$0xff]
    %v926 = vld [vmem:[%s14 + $0x58] sm:$0xff]
    %v927 = vld [vmem:[%s14 + $0x60] sm:$0xff]
    %v928 = vld [vmem:[%s14 + $0x68] sm:$0xff]
    %v929 = vld [vmem:[%s14 + $0x70] sm:$0xff]
    %v930 = vld [vmem:[%s14 + $0x78] sm:$0xff]
    %v931 = vld [vmem:[%s14 + $0x80] sm:$0xff]
    %v932 = vld [vmem:[%s14 + $0x88] sm:$0xff]
    %v933 = vld [vmem:[%s14 + $0x90] sm:$0xff]
    %v934 = vld [vmem:[%s14 + $0x98] sm:$0xff]
    %v935 = vld [vmem:[%s14 + $0xa0] sm:$0xff]
    %v936 = vld [vmem:[%s14 + $0xa8] sm:$0xff]
    %v937 = vld [vmem:[%s14 + $0xb0] sm:$0xff]
    %v938 = vld [vmem:[%s14 + $0xb8] sm:$0xff]
    %v939 = vld [vmem:[%s14 + $0xc0] sm:$0xff]
    %v940 = vld [vmem:[%s14 + $0xc8] sm:$0xff]
    %v941 = vld [vmem:[%s14 + $0xd0] sm:$0xff]
    %v942 = vld [vmem:[%s14 + $0xd8] sm:$0xff]
    %v943 = vld [vmem:[%s14 + $0xe0] sm:$0xff]
    %v944 = vld [vmem:[%s14 + $0xe8] sm:$0xff]
    %v945 = vld [vmem:[%s14 + $0xf0] sm:$0xff]
    %v946 = vld [vmem:[%s14 + $0xf8] sm:$0xff]
    %v947 = vld [vmem:[%s14 + $0x100] sm:$0xff]
    %v948 = vld [vmem:[%s14 + $0x108] sm:$0xff]
    %v949 = vld [vmem:[%s14 + $0x110] sm:$0xff]
    %v950 = vld [vmem:[%s14 + $0x118] sm:$0xff]
    %v951 = vld [vmem:[%s14 + $0x120] sm:$0xff]
    %v952 = vld [vmem:[%s14 + $0x128] sm:$0xff]
    %v953 = vld [vmem:[%s14 + $0x130] sm:$0xff]
    %v954 = vld [vmem:[%s14 + $0x138] sm:$0xff]
    %v955 = vld [vmem:[%s14 + $0x140] sm:$0xff]
    %v956 = vld [vmem:[%s14 + $0x148] sm:$0xff]
    %v957 = vld [vmem:[%s14 + $0x150] sm:$0xff]
    %v958 = vld [vmem:[%s14 + $0x158] sm:$0xff]
    %v959 = vld [vmem:[%s14 + $0x160] sm:$0xff]
    %v960 = vld [vmem:[%s14 + $0x168] sm:$0xff]
    %v961 = vld [vmem:[%s14 + $0x170] sm:$0xff]
    %v962 = vld [vmem:[%s14 + $0x178] sm:$0xff]
    %v963 = vld [vmem:[%s14 + $0x180] sm:$0xff]
    %v964 = vld [vmem:[%s14 + $0x188] sm:$0xff]
    %v965 = vld [vmem:[%s14 + $0x190] sm:$0xff]
    %v966 = vld [vmem:[%s14 + $0x198] sm:$0xff]
    %v967 = vld [vmem:[%s14 + $0x1a0] sm:$0xff]
    %v968 = vld [vmem:[%s14 + $0x1a8] sm:$0xff]
    %v969 = vld [vmem:[%s14 + $0x1b0] sm:$0xff]
    %v970 = vld [vmem:[%s14 + $0x1b8] sm:$0xff]
    %v971 = vld [vmem:[%s14 + $0x1c0] sm:$0xff]
    %v972 = vld [vmem:[%s14 + $0x1c8] sm:$0xff]
    %v973 = vld [vmem:[%s14 + $0x1d0] sm:$0xff]
    %v974 = vld [vmem:[%s14 + $0x1d8] sm:$0xff]
    %v975 = vld [vmem:[%s14 + $0x1e0] sm:$0xff]
    %v976 = vld [vmem:[%s14 + $0x1e8] sm:$0xff]
    %v977 = vld [vmem:[%s14 + $0x1f0] sm:$0xff]
    %v978 = vld [vmem:[%s14 + $0x1f8] sm:$0xff]
    %v979 = vld [vmem:[%s15] sm:$0xf]
    %v981 = vperm.slane %v979, 0
    %v982 = vperm.slane %v979, 1
    %v983 = vperm.slane %v979, 2
    %v984 = vperm.slane %v979, 3
    %v1053 = vunpack.c.l.b16 %v915
    %v1054 = vunpack.c.h.b16 %v915
    %v1055 = vunpack.c.l.b16 %v916
    %v1056 = vunpack.c.h.b16 %v916
    %v1057 = vunpack.c.l.b16 %v917
    %v1058 = vunpack.c.h.b16 %v917
    %v1059 = vunpack.c.l.b16 %v918
    %v1060 = vunpack.c.h.b16 %v918
    %v1061 = vunpack.c.l.b16 %v919
    %v1062 = vunpack.c.h.b16 %v919
    %v1063 = vunpack.c.l.b16 %v920
    %v1064 = vunpack.c.h.b16 %v920
    %v1065 = vunpack.c.l.b16 %v921
    %v1066 = vunpack.c.h.b16 %v921
    %v1067 = vunpack.c.l.b16 %v922
    %v1068 = vunpack.c.h.b16 %v922
    %v1069 = vunpack.c.l.b16 %v923
    %v1070 = vunpack.c.h.b16 %v923
    %v1071 = vunpack.c.l.b16 %v924
    %v1072 = vunpack.c.h.b16 %v924
    %v1073 = vunpack.c.l.b16 %v925
    %v1074 = vunpack.c.h.b16 %v925
    %v1075 = vunpack.c.l.b16 %v926
    %v1076 = vunpack.c.h.b16 %v926
    %v1077 = vunpack.c.l.b16 %v927
    %v1078 = vunpack.c.h.b16 %v927
    %v1079 = vunpack.c.l.b16 %v928
    %v1080 = vunpack.c.h.b16 %v928
    %v1081 = vunpack.c.l.b16 %v929
    %v1082 = vunpack.c.h.b16 %v929
    %v1083 = vunpack.c.l.b16 %v930
    %v1084 = vunpack.c.h.b16 %v930
    %v1085 = vunpack.c.l.b16 %v931
    %v1086 = vunpack.c.h.b16 %v931
    %v1087 = vunpack.c.l.b16 %v932
    %v1088 = vunpack.c.h.b16 %v932
    %v1089 = vunpack.c.l.b16 %v933
    %v1090 = vunpack.c.h.b16 %v933
    %v1091 = vunpack.c.l.b16 %v934
    %v1092 = vunpack.c.h.b16 %v934
    %v1093 = vunpack.c.l.b16 %v935
    %v1094 = vunpack.c.h.b16 %v935
    %v1095 = vunpack.c.l.b16 %v936
    %v1096 = vunpack.c.h.b16 %v936
    %v1097 = vunpack.c.l.b16 %v937
    %v1098 = vunpack.c.h.b16 %v937
    %v1099 = vunpack.c.l.b16 %v938
    %v1100 = vunpack.c.h.b16 %v938
    %v1101 = vunpack.c.l.b16 %v939
    %v1102 = vunpack.c.h.b16 %v939
    %v1103 = vunpack.c.l.b16 %v940
    %v1104 = vunpack.c.h.b16 %v940
    %v1105 = vunpack.c.l.b16 %v941
    %v1106 = vunpack.c.h.b16 %v941
    %v1107 = vunpack.c.l.b16 %v942
    %v1108 = vunpack.c.h.b16 %v942
    %v1109 = vunpack.c.l.b16 %v943
    %v1110 = vunpack.c.h.b16 %v943
    %v1111 = vunpack.c.l.b16 %v944
    %v1112 = vunpack.c.h.b16 %v944
    %v1113 = vunpack.c.l.b16 %v945
    %v1114 = vunpack.c.h.b16 %v945
    %v1115 = vunpack.c.l.b16 %v946
    %v1116 = vunpack.c.h.b16 %v946
    %v1117 = vunpack.c.l.b16 %v947
    %v1118 = vunpack.c.h.b16 %v947
    %v1119 = vunpack.c.l.b16 %v948
    %v1120 = vunpack.c.h.b16 %v948
    %v1121 = vunpack.c.l.b16 %v949
    %v1122 = vunpack.c.h.b16 %v949
    %v1123 = vunpack.c.l.b16 %v950
    %v1124 = vunpack.c.h.b16 %v950
    %v1125 = vunpack.c.l.b16 %v951
    %v1126 = vunpack.c.h.b16 %v951
    %v1127 = vunpack.c.l.b16 %v952
    %v1128 = vunpack.c.h.b16 %v952
    %v1129 = vunpack.c.l.b16 %v953
    %v1130 = vunpack.c.h.b16 %v953
    %v1131 = vunpack.c.l.b16 %v954
    %v1132 = vunpack.c.h.b16 %v954
    %v1133 = vunpack.c.l.b16 %v955
    %v1134 = vunpack.c.h.b16 %v955
    %v1135 = vunpack.c.l.b16 %v956
    %v1136 = vunpack.c.h.b16 %v956
    %v1137 = vunpack.c.l.b16 %v957
    %v1138 = vunpack.c.h.b16 %v957
    %v1139 = vunpack.c.l.b16 %v958
    %v1140 = vunpack.c.h.b16 %v958
    %v1141 = vunpack.c.l.b16 %v959
    %v1142 = vunpack.c.h.b16 %v959
    %v1143 = vunpack.c.l.b16 %v960
    %v1144 = vunpack.c.h.b16 %v960
    %v1145 = vunpack.c.l.b16 %v961
    %v1146 = vunpack.c.h.b16 %v961
    %v1147 = vunpack.c.l.b16 %v962
    %v1148 = vunpack.c.h.b16 %v962
    %v1149 = vunpack.c.l.b16 %v963
    %v1150 = vunpack.c.h.b16 %v963
    %v1151 = vunpack.c.l.b16 %v964
    %v1152 = vunpack.c.h.b16 %v964
    %v1153 = vunpack.c.l.b16 %v965
    %v1154 = vunpack.c.h.b16 %v965
    %v1155 = vunpack.c.l.b16 %v966
    %v1156 = vunpack.c.h.b16 %v966
    %v1157 = vunpack.c.l.b16 %v967
    %v1158 = vunpack.c.h.b16 %v967
    %v1159 = vunpack.c.l.b16 %v968
    %v1160 = vunpack.c.h.b16 %v968
    %v1161 = vunpack.c.l.b16 %v969
    %v1162 = vunpack.c.h.b16 %v969
    %v1163 = vunpack.c.l.b16 %v970
    %v1164 = vunpack.c.h.b16 %v970
    %v1165 = vunpack.c.l.b16 %v971
    %v1166 = vunpack.c.h.b16 %v971
    %v1167 = vunpack.c.l.b16 %v972
    %v1168 = vunpack.c.h.b16 %v972
    %v1169 = vunpack.c.l.b16 %v973
    %v1170 = vunpack.c.h.b16 %v973
    %v1171 = vunpack.c.l.b16 %v974
    %v1172 = vunpack.c.h.b16 %v974
    %v1173 = vunpack.c.l.b16 %v975
    %v1174 = vunpack.c.h.b16 %v975
    %v1175 = vunpack.c.l.b16 %v976
    %v1176 = vunpack.c.h.b16 %v976
    %v1177 = vunpack.c.l.b16 %v977
    %v1178 = vunpack.c.h.b16 %v977
    %v1179 = vunpack.c.l.b16 %v978
    %v1180 = vunpack.c.h.b16 %v978
    %v1181 = vpack.c.b16 %v1057, %v1053
    %v1182 = vpack.c.b16 %v1058, %v1054
    %v1183 = vpack.c.b16 %v1059, %v1055
    %v1184 = vpack.c.b16 %v1060, %v1056
    %v1185 = vpack.c.b16 %v1065, %v1061
    %v1186 = vpack.c.b16 %v1066, %v1062
    %v1187 = vpack.c.b16 %v1067, %v1063
    %v1188 = vpack.c.b16 %v1068, %v1064
    %v1189 = vpack.c.b16 %v1073, %v1069
    %v1190 = vpack.c.b16 %v1074, %v1070
    %v1191 = vpack.c.b16 %v1075, %v1071
    %v1192 = vpack.c.b16 %v1076, %v1072
    %v1193 = vpack.c.b16 %v1081, %v1077
    %v1194 = vpack.c.b16 %v1082, %v1078
    %v1195 = vpack.c.b16 %v1083, %v1079
    %v1196 = vpack.c.b16 %v1084, %v1080
    %v1197 = vpack.c.b16 %v1089, %v1085
    %v1198 = vpack.c.b16 %v1090, %v1086
    %v1199 = vpack.c.b16 %v1091, %v1087
    %v1200 = vpack.c.b16 %v1092, %v1088
    %v1201 = vpack.c.b16 %v1097, %v1093
    %v1202 = vpack.c.b16 %v1098, %v1094
    %v1203 = vpack.c.b16 %v1099, %v1095
    %v1204 = vpack.c.b16 %v1100, %v1096
    %v1205 = vpack.c.b16 %v1105, %v1101
    %v1206 = vpack.c.b16 %v1106, %v1102
    %v1207 = vpack.c.b16 %v1107, %v1103
    %v1208 = vpack.c.b16 %v1108, %v1104
    %v1209 = vpack.c.b16 %v1113, %v1109
    %v1210 = vpack.c.b16 %v1114, %v1110
    %v1211 = vpack.c.b16 %v1115, %v1111
    %v1212 = vpack.c.b16 %v1116, %v1112
    %v1213 = vpack.c.b16 %v1121, %v1117
    %v1214 = vpack.c.b16 %v1122, %v1118
    %v1215 = vpack.c.b16 %v1123, %v1119
    %v1216 = vpack.c.b16 %v1124, %v1120
    %v1217 = vpack.c.b16 %v1129, %v1125
    %v1218 = vpack.c.b16 %v1130, %v1126
    %v1219 = vpack.c.b16 %v1131, %v1127
    %v1220 = vpack.c.b16 %v1132, %v1128
    %v1221 = vpack.c.b16 %v1137, %v1133
    %v1222 = vpack.c.b16 %v1138, %v1134
    %v1223 = vpack.c.b16 %v1139, %v1135
    %v1224 = vpack.c.b16 %v1140, %v1136
    %v1225 = vpack.c.b16 %v1145, %v1141
    %v1226 = vpack.c.b16 %v1146, %v1142
    %v1227 = vpack.c.b16 %v1147, %v1143
    %v1228 = vpack.c.b16 %v1148, %v1144
    %v1229 = vpack.c.b16 %v1153, %v1149
    %v1230 = vpack.c.b16 %v1154, %v1150
    %v1231 = vpack.c.b16 %v1155, %v1151
    %v1232 = vpack.c.b16 %v1156, %v1152
    %v1233 = vpack.c.b16 %v1161, %v1157
    %v1234 = vpack.c.b16 %v1162, %v1158
    %v1235 = vpack.c.b16 %v1163, %v1159
    %v1236 = vpack.c.b16 %v1164, %v1160
    %v1237 = vpack.c.b16 %v1169, %v1165
    %v1238 = vpack.c.b16 %v1170, %v1166
    %v1239 = vpack.c.b16 %v1171, %v1167
    %v1240 = vpack.c.b16 %v1172, %v1168
    %v1241 = vpack.c.b16 %v1177, %v1173
    %v1242 = vpack.c.b16 %v1178, %v1174
    %v1243 = vpack.c.b16 %v1179, %v1175
    %v1244 = vpack.c.b16 %v1180, %v1176
    %1309 = vmatpush.bf16.msra.mxu0 %v1209
    %1310 = vmatpush.bf16.msra.mxu0 %v1205
    %1311 = vmatpush.bf16.msra.mxu0 %v1201
    %1312 = vmatpush.bf16.msra.mxu0 %v1197
    %1313 = vmatpush.bf16.msra.mxu0 %v1193
    %1314 = vmatpush.bf16.msra.mxu0 %v1189
    %1315 = vmatpush.bf16.msra.mxu0 %v1185
    %1316 = vmatpush.bf16.msra.mxu0 %v1181
    %1317 = vmatmul.bf16.gmra.mxu0 %v913
    %v1318 = vpop.f32.mrf.mxu0
    %v1319 = vadd.f32 %v981, %v1318
    %v1320 = vpop.f32.mrf.mxu0
    %v1321 = vadd.f32 %v981, %v1320
    %1322 = vdwg.mxu0
    %1323 = vmatpush.bf16.msra.mxu0 %v1241
    %1324 = vmatpush.bf16.msra.mxu0 %v1237
    %1325 = vmatpush.bf16.msra.mxu0 %v1233
    %1326 = vmatpush.bf16.msra.mxu0 %v1229
    %1327 = vmatpush.bf16.msra.mxu0 %v1225
    %1328 = vmatpush.bf16.msra.mxu0 %v1221
    %1329 = vmatpush.bf16.msra.mxu0 %v1217
    %1330 = vmatpush.bf16.msra.mxu0 %v1213
    %1331 = vmatmul.bf16.gmra.mxu0 %v914
    %v1332 = vpop.f32.mrf.mxu0
    %v1333 = vadd.f32 %v1319, %v1332
    %v1334 = vpop.f32.mrf.mxu0
    %v1335 = vadd.f32 %v1321, %v1334
    %1336 = vdwg.mxu0
    %1337 = vmatpush.bf16.msra.mxu0 %v1210
    %1338 = vmatpush.bf16.msra.mxu0 %v1206
    %1339 = vmatpush.bf16.msra.mxu0 %v1202
    %1340 = vmatpush.bf16.msra.mxu0 %v1198
    %1341 = vmatpush.bf16.msra.mxu0 %v1194
    %1342 = vmatpush.bf16.msra.mxu0 %v1190
    %1343 = vmatpush.bf16.msra.mxu0 %v1186
    %1344 = vmatpush.bf16.msra.mxu0 %v1182
    %1345 = vmatmul.bf16.gmra.mxu0 %v913
    %v1346 = vpop.f32.mrf.mxu0
    %v1347 = vadd.f32 %v982, %v1346
    %v1348 = vpop.f32.mrf.mxu0
    %v1349 = vadd.f32 %v982, %v1348
    %1350 = vdwg.mxu0
    %1351 = vmatpush.bf16.msra.mxu0 %v1242
    %1352 = vmatpush.bf16.msra.mxu0 %v1238
    %1353 = vmatpush.bf16.msra.mxu0 %v1234
    %1354 = vmatpush.bf16.msra.mxu0 %v1230
    %1355 = vmatpush.bf16.msra.mxu0 %v1226
    %1356 = vmatpush.bf16.msra.mxu0 %v1222
    %1357 = vmatpush.bf16.msra.mxu0 %v1218
    %1358 = vmatpush.bf16.msra.mxu0 %v1214
    %1359 = vmatmul.bf16.gmra.mxu0 %v914
    %v1360 = vpop.f32.mrf.mxu0
    %v1361 = vadd.f32 %v1347, %v1360
    %v1362 = vpop.f32.mrf.mxu0
    %v1363 = vadd.f32 %v1349, %v1362
    %1364 = vdwg.mxu0
    %1365 = vmatpush.bf16.msra.mxu0 %v1211
    %1366 = vmatpush.bf16.msra.mxu0 %v1207
    %1367 = vmatpush.bf16.msra.mxu0 %v1203
    %1368 = vmatpush.bf16.msra.mxu0 %v1199
    %1369 = vmatpush.bf16.msra.mxu0 %v1195
    %1370 = vmatpush.bf16.msra.mxu0 %v1191
    %1371 = vmatpush.bf16.msra.mxu0 %v1187
    %1372 = vmatpush.bf16.msra.mxu0 %v1183
    %1373 = vmatmul.bf16.gmra.mxu0 %v913
    %v1374 = vpop.f32.mrf.mxu0
    %v1375 = vadd.f32 %v983, %v1374
    %v1376 = vpop.f32.mrf.mxu0
    %v1377 = vadd.f32 %v983, %v1376
    %1378 = vdwg.mxu0
    %1379 = vmatpush.bf16.msra.mxu0 %v1243
    %1380 = vmatpush.bf16.msra.mxu0 %v1239
    %1381 = vmatpush.bf16.msra.mxu0 %v1235
    %1382 = vmatpush.bf16.msra.mxu0 %v1231
    %1383 = vmatpush.bf16.msra.mxu0 %v1227
    %1384 = vmatpush.bf16.msra.mxu0 %v1223
    %1385 = vmatpush.bf16.msra.mxu0 %v1219
    %1386 = vmatpush.bf16.msra.mxu0 %v1215
    %1387 = vmatmul.bf16.gmra.mxu0 %v914
    %v1388 = vpop.f32.mrf.mxu0
    %v1389 = vadd.f32 %v1375, %v1388
    %v1390 = vpop.f32.mrf.mxu0
    %v1391 = vadd.f32 %v1377, %v1390
    %1392 = vdwg.mxu0
    %1393 = vmatpush.bf16.msra.mxu0 %v1212
    %1394 = vmatpush.bf16.msra.mxu0 %v1208
    %1395 = vmatpush.bf16.msra.mxu0 %v1204
    %1396 = vmatpush.bf16.msra.mxu0 %v1200
    %1397 = vmatpush.bf16.msra.mxu0 %v1196
    %1398 = vmatpush.bf16.msra.mxu0 %v1192
    %1399 = vmatpush.bf16.msra.mxu0 %v1188
    %1400 = vmatpush.bf16.msra.mxu0 %v1184
    %1401 = vmatmul.bf16.gmra.mxu0 %v913
    %v1402 = vpop.f32.mrf.mxu0
    %v1403 = vadd.f32 %v984, %v1402
    %v1404 = vpop.f32.mrf.mxu0
    %v1405 = vadd.f32 %v984, %v1404
    %1406 = vdwg.mxu0
    %1407 = vmatpush.bf16.msra.mxu0 %v1244
    %1408 = vmatpush.bf16.msra.mxu0 %v1240
    %1409 = vmatpush.bf16.msra.mxu0 %v1236
    %1410 = vmatpush.bf16.msra.mxu0 %v1232
    %1411 = vmatpush.bf16.msra.mxu0 %v1228
    %1412 = vmatpush.bf16.msra.mxu0 %v1224
    %1413 = vmatpush.bf16.msra.mxu0 %v1220
    %1414 = vmatpush.bf16.msra.mxu0 %v1216
    %1415 = vmatmul.bf16.gmra.mxu0 %v914
    %v1416 = vpop.f32.mrf.mxu0
    %v1417 = vadd.f32 %v1403, %v1416
    %v1418 = vpop.f32.mrf.mxu0
    %v1419 = vadd.f32 %v1405, %v1418
    %1420 = vdwg.mxu0
    %v1421 = vmax.f32 %v1333, 0.0
    %v1422 = vmax.f32 %v1361, 0.0
    %v1423 = vmax.f32 %v1389, 0.0
    %v1424 = vmax.f32 %v1417, 0.0
    %v1425 = vmax.f32 %v1335, 0.0
    %v1426 = vmax.f32 %v1363, 0.0
    %v1427 = vmax.f32 %v1391, 0.0
    %v1428 = vmax.f32 %v1419, 0.0
    %v1429 = vpack.c.bf16 %v1425, %v1421
    %v1430 = vpack.c.bf16 %v1426, %v1422
    %v1431 = vpack.c.bf16 %v1427, %v1423
    %v1432 = vpack.c.bf16 %v1428, %v1424
    %v1433 = vld [vmem:[%s16] sm:$0xf]
    %v1434 = vld [vmem:[%s16 + $0x4] sm:$0xf]
    %v1435 = vld [vmem:[%s16 + $0x8] sm:$0xf]
    %v1436 = vld [vmem:[%s16 + $0xc] sm:$0xf]
    %v1437 = vld [vmem:[%s16 + $0x10] sm:$0xf]
    %v1438 = vld [vmem:[%s16 + $0x14] sm:$0xf]
    %v1439 = vld [vmem:[%s16 + $0x18] sm:$0xf]
    %v1440 = vld [vmem:[%s16 + $0x1c] sm:$0xf]
    %v1441 = vld [vmem:[%s16 + $0x20] sm:$0xf]
    %v1442 = vld [vmem:[%s16 + $0x24] sm:$0xf]
    %v1443 = vld [vmem:[%s16 + $0x28] sm:$0xf]
    %v1444 = vld [vmem:[%s16 + $0x2c] sm:$0xf]
    %v1445 = vld [vmem:[%s16 + $0x30] sm:$0xf]
    %v1446 = vld [vmem:[%s16 + $0x34] sm:$0xf]
    %v1447 = vld [vmem:[%s16 + $0x38] sm:$0xf]
    %v1448 = vld [vmem:[%s16 + $0x3c] sm:$0xf]
    %v1449 = vld [vmem:[%s16 + $0x40] sm:$0xf]
    %v1450 = vld [vmem:[%s16 + $0x44] sm:$0xf]
    %v1451 = vld [vmem:[%s16 + $0x48] sm:$0xf]
    %v1452 = vld [vmem:[%s16 + $0x4c] sm:$0xf]
    %v1453 = vld [vmem:[%s16 + $0x50] sm:$0xf]
    %v1454 = vld [vmem:[%s16 + $0x54] sm:$0xf]
    %v1455 = vld [vmem:[%s16 + $0x58] sm:$0xf]
    %v1456 = vld [vmem:[%s16 + $0x5c] sm:$0xf]
    %v1457 = vld [vmem:[%s16 + $0x60] sm:$0xf]
    %v1458 = vld [vmem:[%s16 + $0x64] sm:$0xf]
    %v1459 = vld [vmem:[%s16 + $0x68] sm:$0xf]
    %v1460 = vld [vmem:[%s16 + $0x6c] sm:$0xf]
    %v1461 = vld [vmem:[%s16 + $0x70] sm:$0xf]
    %v1462 = vld [vmem:[%s16 + $0x74] sm:$0xf]
    %v1463 = vld [vmem:[%s16 + $0x78] sm:$0xf]
    %v1464 = vld [vmem:[%s16 + $0x7c] sm:$0xf]
    %v1465 = vld [vmem:[%s16 + $0x80] sm:$0xf]
    %v1466 = vld [vmem:[%s16 + $0x84] sm:$0xf]
    %v1467 = vld [vmem:[%s16 + $0x88] sm:$0xf]
    %v1468 = vld [vmem:[%s16 + $0x8c] sm:$0xf]
    %v1469 = vld [vmem:[%s16 + $0x90] sm:$0xf]
    %v1470 = vld [vmem:[%s16 + $0x94] sm:$0xf]
    %v1471 = vld [vmem:[%s16 + $0x98] sm:$0xf]
    %v1472 = vld [vmem:[%s16 + $0x9c] sm:$0xf]
    %v1473 = vld [vmem:[%s16 + $0xa0] sm:$0xf]
    %v1474 = vld [vmem:[%s16 + $0xa4] sm:$0xf]
    %v1475 = vld [vmem:[%s16 + $0xa8] sm:$0xf]
    %v1476 = vld [vmem:[%s16 + $0xac] sm:$0xf]
    %v1477 = vld [vmem:[%s16 + $0xb0] sm:$0xf]
    %v1478 = vld [vmem:[%s16 + $0xb4] sm:$0xf]
    %v1479 = vld [vmem:[%s16 + $0xb8] sm:$0xf]
    %v1480 = vld [vmem:[%s16 + $0xbc] sm:$0xf]
    %v1481 = vld [vmem:[%s16 + $0xc0] sm:$0xf]
    %v1482 = vld [vmem:[%s16 + $0xc4] sm:$0xf]
    %v1483 = vld [vmem:[%s16 + $0xc8] sm:$0xf]
    %v1484 = vld [vmem:[%s16 + $0xcc] sm:$0xf]
    %v1485 = vld [vmem:[%s16 + $0xd0] sm:$0xf]
    %v1486 = vld [vmem:[%s16 + $0xd4] sm:$0xf]
    %v1487 = vld [vmem:[%s16 + $0xd8] sm:$0xf]
    %v1488 = vld [vmem:[%s16 + $0xdc] sm:$0xf]
    %v1489 = vld [vmem:[%s16 + $0xe0] sm:$0xf]
    %v1490 = vld [vmem:[%s16 + $0xe4] sm:$0xf]
    %v1491 = vld [vmem:[%s16 + $0xe8] sm:$0xf]
    %v1492 = vld [vmem:[%s16 + $0xec] sm:$0xf]
    %v1493 = vld [vmem:[%s16 + $0xf0] sm:$0xf]
    %v1494 = vld [vmem:[%s16 + $0xf4] sm:$0xf]
    %v1495 = vld [vmem:[%s16 + $0xf8] sm:$0xf]
    %v1496 = vld [vmem:[%s16 + $0xfc] sm:$0xf]
    %v1497 = vld [vmem:[%s17] sm:$0x1]
    %v1499 = vperm.slane %v1497, 0
    %v1565 = vunpack.c.l.b16 %v1433
    %v1566 = vunpack.c.l.b16 %v1434
    %v1567 = vunpack.c.l.b16 %v1435
    %v1568 = vunpack.c.l.b16 %v1436
    %v1569 = vunpack.c.l.b16 %v1437
    %v1570 = vunpack.c.l.b16 %v1438
    %v1571 = vunpack.c.l.b16 %v1439
    %v1572 = vunpack.c.l.b16 %v1440
    %v1573 = vunpack.c.l.b16 %v1441
    %v1574 = vunpack.c.l.b16 %v1442
    %v1575 = vunpack.c.l.b16 %v1443
    %v1576 = vunpack.c.l.b16 %v1444
    %v1577 = vunpack.c.l.b16 %v1445
    %v1578 = vunpack.c.l.b16 %v1446
    %v1579 = vunpack.c.l.b16 %v1447
    %v1580 = vunpack.c.l.b16 %v1448
    %v1581 = vunpack.c.l.b16 %v1449
    %v1582 = vunpack.c.l.b16 %v1450
    %v1583 = vunpack.c.l.b16 %v1451
    %v1584 = vunpack.c.l.b16 %v1452
    %v1585 = vunpack.c.l.b16 %v1453
    %v1586 = vunpack.c.l.b16 %v1454
    %v1587 = vunpack.c.l.b16 %v1455
    %v1588 = vunpack.c.l.b16 %v1456
    %v1589 = vunpack.c.l.b16 %v1457
    %v1590 = vunpack.c.l.b16 %v1458
    %v1591 = vunpack.c.l.b16 %v1459
    %v1592 = vunpack.c.l.b16 %v1460
    %v1593 = vunpack.c.l.b16 %v1461
    %v1594 = vunpack.c.l.b16 %v1462
    %v1595 = vunpack.c.l.b16 %v1463
    %v1596 = vunpack.c.l.b16 %v1464
    %v1597 = vunpack.c.l.b16 %v1465
    %v1598 = vunpack.c.l.b16 %v1466
    %v1599 = vunpack.c.l.b16 %v1467
    %v1600 = vunpack.c.l.b16 %v1468
    %v1601 = vunpack.c.l.b16 %v1469
    %v1602 = vunpack.c.l.b16 %v1470
    %v1603 = vunpack.c.l.b16 %v1471
    %v1604 = vunpack.c.l.b16 %v1472
    %v1605 = vunpack.c.l.b16 %v1473
    %v1606 = vunpack.c.l.b16 %v1474
    %v1607 = vunpack.c.l.b16 %v1475
    %v1608 = vunpack.c.l.b16 %v1476
    %v1609 = vunpack.c.l.b16 %v1477
    %v1610 = vunpack.c.l.b16 %v1478
    %v1611 = vunpack.c.l.b16 %v1479
    %v1612 = vunpack.c.l.b16 %v1480
    %v1613 = vunpack.c.l.b16 %v1481
    %v1614 = vunpack.c.l.b16 %v1482
    %v1615 = vunpack.c.l.b16 %v1483
    %v1616 = vunpack.c.l.b16 %v1484
    %v1617 = vunpack.c.l.b16 %v1485
    %v1618 = vunpack.c.l.b16 %v1486
    %v1619 = vunpack.c.l.b16 %v1487
    %v1620 = vunpack.c.l.b16 %v1488
    %v1621 = vunpack.c.l.b16 %v1489
    %v1622 = vunpack.c.l.b16 %v1490
    %v1623 = vunpack.c.l.b16 %v1491
    %v1624 = vunpack.c.l.b16 %v1492
    %v1625 = vunpack.c.l.b16 %v1493
    %v1626 = vunpack.c.l.b16 %v1494
    %v1627 = vunpack.c.l.b16 %v1495
    %v1628 = vunpack.c.l.b16 %v1496
    %v1629 = vpack.c.b16 %v1566, %v1565
    %v1630 = vpack.c.b16 %v1568, %v1567
    %v1631 = vpack.c.b16 %v1570, %v1569
    %v1632 = vpack.c.b16 %v1572, %v1571
    %v1633 = vpack.c.b16 %v1574, %v1573
    %v1634 = vpack.c.b16 %v1576, %v1575
    %v1635 = vpack.c.b16 %v1578, %v1577
    %v1636 = vpack.c.b16 %v1580, %v1579
    %v1637 = vpack.c.b16 %v1582, %v1581
    %v1638 = vpack.c.b16 %v1584, %v1583
    %v1639 = vpack.c.b16 %v1586, %v1585
    %v1640 = vpack.c.b16 %v1588, %v1587
    %v1641 = vpack.c.b16 %v1590, %v1589
    %v1642 = vpack.c.b16 %v1592, %v1591
    %v1643 = vpack.c.b16 %v1594, %v1593
    %v1644 = vpack.c.b16 %v1596, %v1595
    %v1645 = vpack.c.b16 %v1598, %v1597
    %v1646 = vpack.c.b16 %v1600, %v1599
    %v1647 = vpack.c.b16 %v1602, %v1601
    %v1648 = vpack.c.b16 %v1604, %v1603
    %v1649 = vpack.c.b16 %v1606, %v1605
    %v1650 = vpack.c.b16 %v1608, %v1607
    %v1651 = vpack.c.b16 %v1610, %v1609
    %v1652 = vpack.c.b16 %v1612, %v1611
    %v1653 = vpack.c.b16 %v1614, %v1613
    %v1654 = vpack.c.b16 %v1616, %v1615
    %v1655 = vpack.c.b16 %v1618, %v1617
    %v1656 = vpack.c.b16 %v1620, %v1619
    %v1657 = vpack.c.b16 %v1622, %v1621
    %v1658 = vpack.c.b16 %v1624, %v1623
    %v1659 = vpack.c.b16 %v1626, %v1625
    %v1660 = vpack.c.b16 %v1628, %v1627
    %1693 = vmatpush.bf16.msra.mxu0 %v1636
    %1694 = vmatpush.bf16.msra.mxu0 %v1635
    %1695 = vmatpush.bf16.msra.mxu0 %v1634
    %1696 = vmatpush.bf16.msra.mxu0 %v1633
    %1697 = vmatpush.bf16.msra.mxu0 %v1632
    %1698 = vmatpush.bf16.msra.mxu0 %v1631
    %1699 = vmatpush.bf16.msra.mxu0 %v1630
    %1700 = vmatpush.bf16.msra.mxu0 %v1629
    %1701 = vmatmul.bf16.gmra.mxu0 %v1429
    %v1702 = vpop.f32.mrf.mxu0
    %v1703 = vadd.f32 %v1499, %v1702
    %v1704 = vpop.f32.mrf.mxu0
    %v1705 = vadd.f32 %v1499, %v1704
    %1706 = vdwg.mxu0
    %1707 = vmatpush.bf16.msra.mxu0 %v1644
    %1708 = vmatpush.bf16.msra.mxu0 %v1643
    %1709 = vmatpush.bf16.msra.mxu0 %v1642
    %1710 = vmatpush.bf16.msra.mxu0 %v1641
    %1711 = vmatpush.bf16.msra.mxu0 %v1640
    %1712 = vmatpush.bf16.msra.mxu0 %v1639
    %1713 = vmatpush.bf16.msra.mxu0 %v1638
    %1714 = vmatpush.bf16.msra.mxu0 %v1637
    %1715 = vmatmul.bf16.gmra.mxu0 %v1430
    %v1716 = vpop.f32.mrf.mxu0
    %v1717 = vadd.f32 %v1703, %v1716
    %v1718 = vpop.f32.mrf.mxu0
    %v1719 = vadd.f32 %v1705, %v1718
    %1720 = vdwg.mxu0
    %1721 = vmatpush.bf16.msra.mxu0 %v1652
    %1722 = vmatpush.bf16.msra.mxu0 %v1651
    %1723 = vmatpush.bf16.msra.mxu0 %v1650
    %1724 = vmatpush.bf16.msra.mxu0 %v1649
    %1725 = vmatpush.bf16.msra.mxu0 %v1648
    %1726 = vmatpush.bf16.msra.mxu0 %v1647
    %1727 = vmatpush.bf16.msra.mxu0 %v1646
    %1728 = vmatpush.bf16.msra.mxu0 %v1645
    %1729 = vmatmul.bf16.gmra.mxu0 %v1431
    %v1730 = vpop.f32.mrf.mxu0
    %v1731 = vadd.f32 %v1717, %v1730
    %v1732 = vpop.f32.mrf.mxu0
    %v1733 = vadd.f32 %v1719, %v1732
    %1734 = vdwg.mxu0
    %1735 = vmatpush.bf16.msra.mxu0 %v1660
    %1736 = vmatpush.bf16.msra.mxu0 %v1659
    %1737 = vmatpush.bf16.msra.mxu0 %v1658
    %1738 = vmatpush.bf16.msra.mxu0 %v1657
    %1739 = vmatpush.bf16.msra.mxu0 %v1656
    %1740 = vmatpush.bf16.msra.mxu0 %v1655
    %1741 = vmatpush.bf16.msra.mxu0 %v1654
    %1742 = vmatpush.bf16.msra.mxu0 %v1653
    %1743 = vmatmul.bf16.gmra.mxu0 %v1432
    %v1744 = vpop.f32.mrf.mxu0
    %v1745 = vadd.f32 %v1731, %v1744
    %v1746 = vpop.f32.mrf.mxu0
    %v1747 = vadd.f32 %v1733, %v1746
    %1748 = vdwg.mxu0
    %vm1749 = vcmask 97280
    %1750 = vst.msk [vmem:[#allocation2] sm:$0xff] %vm1749, %v1745
    %1751 = vst.msk [vmem:[#allocation2 + $0x8] sm:$0xff] %vm1749, %v1747
    // Predicated region
    $region74: #{gcn_st_forward.1} parent=1 // pred_check
      _
    $region75: #{gcn_st_forward.1} parent=1 // pred_check_branch
      %1753 = sbr.rel (0) target = $region77
    $region76: #{gcn_st_forward.1} parent=1 // pred_region
      %1755 = vsyncadd [#allocation3], 0
      %s1756 = sshll.u32 [#allocation2], 4
      %s1757 = int_to_ptr.vmem [resolvable:$true] %s1756
      %s1758 = sshll.u32 %s18, 4
      %s1759 = int_to_ptr.hbm [resolvable:$true] %s1758
      %1764 = dma.vmem_to_hbm [thread:$0]  %s1757, 256, %s1759, [#allocation3], 128, 128, 8
    $region77: #{gcn_st_forward.1} parent=1 // pred_fallthru
      _
    // Predicated region
    $region78: #{gcn_st_forward.1} parent=1 // pred_check
      _
    $region79: #{gcn_st_forward.1} parent=1 // pred_check_branch
      %1766 = sbr.rel (0) target = $region81
    $region80: #{gcn_st_forward.1} parent=1 // pred_region
      %1768 = dma.done [#allocation3], 256
    $region81: #{gcn_st_forward.1} parent=1 // pred_fallthru
      _
    %1769 = vsyncpa [#allocation3], 1

</llo_original>
